<compile_context>
chip_gen: v7x
topology: tpu7x:2x2x1
jax: 0.10.0
libtpu: 0.0.40
codegen_flags: <defaults>
</compile_context>

<pallas_src>
import functools
import math

import jax
import jax.numpy as jnp
from jax import lax
from jax.experimental import pallas as pl
from jax.experimental.pallas import tpu as pltpu

LN_EPS = 1e-5
NEG_INF = -1e30  # attention scores are kept in f32, so this is safe


def _ln(x, g, b):
    # f32 layernorm over the last axis
    mu = jnp.mean(x, axis=-1, keepdims=True)
    var = jnp.mean(jnp.square(x - mu), axis=-1, keepdims=True)
    return (x - mu) * lax.rsqrt(var + LN_EPS) * g + b


# -----------------------------------------------------------------------------
# Kernel 1: the full transformer.  grid = (batch_tiles, layers); activation is
# resident in the output block across the layer ("arbitrary") axis.
# -----------------------------------------------------------------------------
def transformer_kernel(prompts_ref, pos_ref, cmp_ref,
                       ln1g_ref, ln1b_ref, w_in_ref, b_in_ref,
                       w_out_ref, b_out_ref, ln2g_ref, ln2b_ref,
                       w_fc_ref, b_fc_ref, w_pr_ref, b_pr_ref,
                       o_ref, mask_ref,
                       *, num_heads, num_compound, n_ctx, ff_chunk):
    l = pl.program_id(1)
    bt, S, D = o_ref.shape
    H = num_heads
    Dh = D // H
    scale = 1.0 / math.sqrt(Dh)
    FF = w_fc_ref.shape[-1]

    # ---- layer 0: initialize resident activation (prompts + pos) and the mask ----
    @pl.when(l == 0)
    def _():
        o_ref[...] = prompts_ref[...] + pos_ref[...][None]
        qi = lax.broadcasted_iota(jnp.int32, (S, S), 0)
        ki = lax.broadcasted_iota(jnp.int32, (S, S), 1)
        mask_ref[...] = jnp.where(ki <= qi, 0.0, NEG_INF).astype(jnp.float32)

    # ---- MaPLe deep-prompt injection for layers 1..num_compound ----
    if num_compound > 0:
        @pl.when(jnp.logical_and(l >= 1, l <= num_compound))
        def _():
            ctx = cmp_ref[...].astype(o_ref.dtype)                  # (n_ctx, D)
            o_ref[:, 1:1 + n_ctx, :] = jnp.broadcast_to(ctx[None], (bt, n_ctx, D))

    x = o_ref[...]                                                  # (bt, S, D) f32

    # ---- multi-head causal self-attention (heads batched) ----
    h = _ln(x, ln1g_ref[...], ln1b_ref[...])
    hb = h.reshape(bt * S, D).astype(w_in_ref.dtype)
    qkv = (jnp.dot(hb, w_in_ref[...], preferred_element_type=jnp.float32)
           + b_in_ref[...]).reshape(bt, S, 3 * D)                   # f32

    def stack_heads(off, pre_scale=1.0):
        return jnp.stack(
            [qkv[:, :, off + hd * Dh: off + (hd + 1) * Dh] * pre_scale
             for hd in range(H)],
            axis=0).reshape(H * bt, S, Dh)

    # Fold 1/sqrt(Dh) into q (smaller tensor than the (S, S) scores).
    q = stack_heads(0, pre_scale=scale).astype(w_in_ref.dtype)
    k = stack_heads(D).astype(w_in_ref.dtype)
    v = stack_heads(2 * D).astype(w_in_ref.dtype)

    s = jnp.einsum('bqd,bkd->bqk', q, k,
                   preferred_element_type=jnp.float32)              # (H*bt, S, S) f32
    s = s + mask_ref[...][None]
    s = s - jnp.max(s, axis=-1, keepdims=True)
    p = jnp.exp(s)
    p = p * pl.reciprocal(jnp.sum(p, axis=-1, keepdims=True), approx=True)
    ctx = jnp.einsum('bqk,bkd->bqd', p.astype(v.dtype), v,
                     preferred_element_type=jnp.float32)            # (H*bt, S, Dh)
    ctx = ctx.reshape(H, bt, S, Dh)
    ctx = jnp.concatenate([ctx[hd] for hd in range(H)], axis=-1)    # (bt, S, D)

    attn = (jnp.dot(ctx.reshape(bt * S, D).astype(w_out_ref.dtype), w_out_ref[...],
                    preferred_element_type=jnp.float32) + b_out_ref[...])
    x = x + attn.reshape(bt, S, D)

    # ---- MLP with QuickGELU, tiled over the FF dimension ----
    h = _ln(x, ln2g_ref[...], ln2b_ref[...])
    hb = h.reshape(bt * S, D).astype(w_fc_ref.dtype)
    mlp = jnp.zeros((bt * S, D), jnp.float32)
    n_chunks = pl.cdiv(FF, ff_chunk)
    for c in range(n_chunks):                                       # static chunk loop
        lo = c * ff_chunk
        hi = min(lo + ff_chunk, FF)
        t = (jnp.dot(hb, w_fc_ref[:, lo:hi], preferred_element_type=jnp.float32)
             + b_fc_ref[:, lo:hi])
        t = t * jax.nn.sigmoid(1.702 * t)                           # QuickGELU (f32)
        mlp = mlp + jnp.dot(t.astype(w_pr_ref.dtype), w_pr_ref[lo:hi, :],
                            preferred_element_type=jnp.float32)
    mlp = mlp + b_pr_ref[...]
    x = x + mlp.reshape(bt, S, D)

    o_ref[...] = x


def run_transformer(prompts, params, cmp_stacked, num_compound, *, num_heads,
                    batch_tile=1, ff_chunk=512):
    B, S, D = prompts.shape
    L = params['w_in'].shape[0]
    FF = params['w_fc'].shape[-1]
    bt = min(batch_tile, B)
    assert B % bt == 0
    n_ctx = cmp_stacked.shape[1]
    ff_chunk = min(ff_chunk, FF)

    def lmap(b, l):            # per-layer stacked params
        return (l, 0, 0)

    if num_compound > 0:
        nc = num_compound

        def cmap(b, l):
            return (jnp.clip(l - 1, 0, nc - 1), 0, 0)
    else:
        def cmap(b, l):
            return (0, 0, 0)

    in_specs = [
        pl.BlockSpec((bt, S, D), lambda b, l: (b, 0, 0)),   # prompts
        pl.BlockSpec((S, D), lambda b, l: (0, 0)),          # positional embedding
        pl.BlockSpec((None, n_ctx, D), cmap),               # compound deep prompts
        pl.BlockSpec((None, 1, D), lmap),                   # ln1_g
        pl.BlockSpec((None, 1, D), lmap),                   # ln1_b
        pl.BlockSpec((None, D, 3 * D), lmap),               # w_in
        pl.BlockSpec((None, 1, 3 * D), lmap),               # b_in
        pl.BlockSpec((None, D, D), lmap),                   # w_out
        pl.BlockSpec((None, 1, D), lmap),                   # b_out
        pl.BlockSpec((None, 1, D), lmap),                   # ln2_g
        pl.BlockSpec((None, 1, D), lmap),                   # ln2_b
        pl.BlockSpec((None, D, FF), lmap),                  # w_fc
        pl.BlockSpec((None, 1, FF), lmap),                  # b_fc
        pl.BlockSpec((None, FF, D), lmap),                  # w_proj
        pl.BlockSpec((None, 1, D), lmap),                   # b_proj
    ]
    args = (prompts, params['positional_embedding'], cmp_stacked,
            params['ln1_g'], params['ln1_b'], params['w_in'], params['b_in'],
            params['w_out'], params['b_out'], params['ln2_g'], params['ln2_b'],
            params['w_fc'], params['b_fc'], params['w_proj'], params['b_proj'])

    # VMEM budget: double-buffered per-layer weights + resident activations + margin
    per_layer_bytes = sum(int(a.size // L) * a.dtype.itemsize for a in args[3:])
    resident_bytes = 4 * (2 * bt * S * D + S * D + S * S) + cmp_stacked.size * 4
    temp_bytes = 4 * bt * S * (3 * D + num_heads * S + ff_chunk + 4 * D)
    vmem_limit = int(min(64 << 20,
                         max(16 << 20,
                             2 * per_layer_bytes + resident_bytes
                             + 2 * temp_bytes + (2 << 20))))

    grid_spec = pltpu.PrefetchScalarGridSpec(
        num_scalar_prefetch=0,
        grid=(B // bt, L),
        in_specs=in_specs,
        out_specs=pl.BlockSpec((bt, S, D), lambda b, l: (b, 0, 0)),
        scratch_shapes=[pltpu.VMEM((S, S), jnp.float32)],
    )

    kernel = functools.partial(transformer_kernel, num_heads=num_heads,
                               num_compound=num_compound, n_ctx=n_ctx,
                               ff_chunk=ff_chunk)

    return pl.pallas_call(
        kernel,
        grid_spec=grid_spec,
        out_shape=jax.ShapeDtypeStruct((B, S, D), jnp.float32),
        compiler_params=pltpu.CompilerParams(
            dimension_semantics=("parallel", "arbitrary"),
            vmem_limit_bytes=vmem_limit),
    )(*args)


# -----------------------------------------------------------------------------
# Kernel 2: ln_final on the EOT token + text projection.
# Scalar-prefetch gather of one row per grid step into a (B, D) VMEM scratch,
# then a single (B, D) @ (D, P) matmul at the last step (lane-dense output).
# -----------------------------------------------------------------------------
def eot_project_kernel(eot_ref, x_ref, g_ref, b_ref, proj_ref, o_ref, rows_ref):
    del eot_ref  # consumed by the index_map
    i = pl.program_id(0)
    rows_ref[pl.ds(i, 1), :] = x_ref[...]                 # gathered (1, D) row

    @pl.when(i == pl.num_programs(0) - 1)
    def _():
        xn = _ln(rows_ref[...], g_ref[...], b_ref[...])   # (B, D) f32
        o_ref[...] = jnp.dot(xn.astype(proj_ref.dtype), proj_ref[...],
                             preferred_element_type=jnp.float32)


def eot_project(x, eot, g, b, proj):
    B, S, D = x.shape
    P = proj.shape[-1]
    grid_spec = pltpu.PrefetchScalarGridSpec(
        num_scalar_prefetch=1,
        grid=(B,),
        in_specs=[
            pl.BlockSpec((None, 1, D), lambda i, eot: (i, eot[i], 0)),
            pl.BlockSpec((1, D), lambda i, eot: (0, 0)),
            pl.BlockSpec((1, D), lambda i, eot: (0, 0)),
            pl.BlockSpec((D, P), lambda i, eot: (0, 0)),
        ],
        out_specs=pl.BlockSpec((B, P), lambda i, eot: (0, 0)),
        scratch_shapes=[pltpu.VMEM((B, D), jnp.float32)],
    )
    return pl.pallas_call(
        eot_project_kernel,
        grid_spec=grid_spec,
        out_shape=jax.ShapeDtypeStruct((B, P), jnp.float32),
        compiler_params=pltpu.CompilerParams(
            dimension_semantics=("arbitrary",),
            vmem_limit_bytes=16 << 20),
    )(eot, x, g, b, proj)


# -----------------------------------------------------------------------------
# TextEncoder.forward glue
# -----------------------------------------------------------------------------
def text_encoder_forward(prompts, tokenized_prompts, compound_prompts_deeper_text,
                         params, num_heads, *, batch_tile=1, ff_chunk=512):
    compound = compound_prompts_deeper_text
    if len(compound) > 0:
        cmp_stacked = jnp.stack([c.astype(jnp.float32) for c in compound], axis=0)
    else:
        cmp_stacked = jnp.zeros((1, 1, prompts.shape[-1]), jnp.float32)

    last_hidden_state = run_transformer(
        prompts, params, cmp_stacked, len(compound),
        num_heads=num_heads, batch_tile=batch_tile, ff_chunk=ff_chunk)

    # CLIP convention: EOT token has the largest id -> argmax gives its position.
    eot = jnp.argmax(tokenized_prompts, axis=-1).astype(jnp.int32)
    text_feats = eot_project(last_hidden_state, eot,
                             params['ln_final_g'], params['ln_final_b'],
                             params['text_projection'])
    return text_feats, last_hidden_state


# -----------------------------------------------------------------------------
# Pure-JAX reference (for correctness checking only)
# -----------------------------------------------------------------------------
def _reference_block(x, params, l, num_heads):
    B, S, D = x.shape
    Dh = D // num_heads

    def w(name):
        return params[name][l].astype(jnp.float32)

    h = _ln(x, w('ln1_g'), w('ln1_b'))
    qkv = h @ w('w_in') + w('b_in')
    q, k, v = jnp.split(qkv, 3, axis=-1)
    q = q.reshape(B, S, num_heads, Dh).transpose(0, 2, 1, 3)
    k = k.reshape(B, S, num_heads, Dh).transpose(0, 2, 1, 3)
    v = v.reshape(B, S, num_heads, Dh).transpose(0, 2, 1, 3)
    s = (q @ k.transpose(0, 1, 3, 2)) / math.sqrt(Dh)
    mask = jnp.tril(jnp.ones((S, S), bool))
    s = jnp.where(mask[None, None], s, NEG_INF)
    p = jax.nn.softmax(s, axis=-1)
    c = (p @ v).transpose(0, 2, 1, 3).reshape(B, S, D)
    x = x + c @ w('w_out') + w('b_out')
    h = _ln(x, w('ln2_g'), w('ln2_b'))
    h = h @ w('w_fc') + w('b_fc')
    h = h * jax.nn.sigmoid(1.702 * h)
    return x + h @ w('w_proj') + w('b_proj')


def reference_forward(prompts, tokenized_prompts, compound_list, params, num_heads):
    x = prompts + params['positional_embedding'][None]
    L = params['w_in'].shape[0]
    counter = 0
    for l in range(L):
        if l > 0 and counter < len(compound_list):
            ctx = compound_list[counter].astype(jnp.float32)
            n_ctx = ctx.shape[0]
            ctx_b = jnp.broadcast_to(ctx[None], (x.shape[0], n_ctx, x.shape[2]))
            x = jnp.concatenate([x[:, :1], ctx_b, x[:, 1 + n_ctx:]], axis=1)
            counter += 1
        x = _reference_block(x, params, l, num_heads)
    last = x
    xn = _ln(x, params['ln_final_g'], params['ln_final_b'])
    eot = jnp.argmax(tokenized_prompts, axis=-1)
    feats = xn[jnp.arange(x.shape[0]), eot] @ params['text_projection'].astype(jnp.float32)
    return feats, last


# -----------------------------------------------------------------------------
# Deterministic synthetic parameter init (stacked per-layer weights, bf16 weights)
# -----------------------------------------------------------------------------
def init_params(key, *, num_layers, width, mlp, seq, proj_dim,
                weight_dtype=jnp.bfloat16):
    L, D, FF = num_layers, width, mlp
    ks = jax.random.split(key, 16)

    def w(k, shape, s, dt):
        return (jax.random.normal(k, shape) * s).astype(dt)

    return dict(
        ln1_g=(1.0 + 0.05 * jax.random.normal(ks[0], (L, 1, D))).astype(jnp.float32),
        ln1_b=w(ks[1], (L, 1, D), 0.05, jnp.float32),
        w_in=w(ks[2], (L, D, 3 * D), 0.02, weight_dtype),
        b_in=w(ks[3], (L, 1, 3 * D), 0.02, jnp.float32),
        w_out=w(ks[4], (L, D, D), 0.02, weight_dtype),
        b_out=w(ks[5], (L, 1, D), 0.02, jnp.float32),
        ln2_g=(1.0 + 0.05 * jax.random.normal(ks[6], (L, 1, D))).astype(jnp.float32),
        ln2_b=w(ks[7], (L, 1, D), 0.05, jnp.float32),
        w_fc=w(ks[8], (L, D, FF), 0.02, weight_dtype),
        b_fc=w(ks[9], (L, 1, FF), 0.02, jnp.float32),
        w_proj=w(ks[10], (L, FF, D), 0.02, weight_dtype),
        b_proj=w(ks[11], (L, 1, D), 0.02, jnp.float32),
        positional_embedding=w(ks[12], (seq, D), 0.01, jnp.float32),
        ln_final_g=(1.0 + 0.05 * jax.random.normal(ks[13], (1, D))).astype(jnp.float32),
        ln_final_b=w(ks[14], (1, D), 0.05, jnp.float32),
        text_projection=w(ks[15], (D, proj_dim), D ** -0.5, weight_dtype),
    )


if __name__ == "__main__":
    B, S, D, H, L, FF, NCTX = 2, 8, 32, 4, 2, 128, 2

    key = jax.random.PRNGKey(0)
    k_prompt, k_param, k_ctx = jax.random.split(key, 3)

    params = init_params(k_param, num_layers=L, width=D, mlp=FF, seq=S, proj_dim=D)
    prompts = (jax.random.normal(k_prompt, (B, S, D)) * 0.1).astype(jnp.float32)
    compound_prompts_deeper_text = [
        (jax.random.normal(k_ctx, (NCTX, D)) * 0.1).astype(jnp.float32)
    ]
    # tokenized prompts: EOT (largest id) at positions 5 and 6 respectively
    tokenized_prompts = jnp.array(
        [[49406, 320, 512, 23, 7, 49407, 0, 0],
         [49406, 320, 512, 23, 7, 9, 49407, 0]], dtype=jnp.int32)

    feats, last_hidden = text_encoder_forward(
        prompts, tokenized_prompts, compound_prompts_deeper_text, params,
        num_heads=H, batch_tile=1, ff_chunk=512)
    jax.block_until_ready((feats, last_hidden))

    ref_feats, ref_last = reference_forward(
        prompts, tokenized_prompts, compound_prompts_deeper_text, params, num_heads=H)

    assert feats.shape == (B, D) and last_hidden.shape == (B, S, D)
    assert bool(jnp.all(jnp.isfinite(feats))) and bool(jnp.all(jnp.isfinite(last_hidden)))
    # tolerance accounts for bf16 matmul operands (reference uses the same bf16
    # weights but f32 activations throughout)
    assert jnp.allclose(feats, ref_feats, atol=2e-2, rtol=2e-2)
    assert jnp.allclose(last_hidden, ref_last, atol=2e-2, rtol=2e-2)

    print("KERNEL_OK")
</pallas_src>

<mosaic_0001>
module attributes {stable_mosaic.version = 11 : i64} {
  func.func @transformer_kernel(%arg0: i32, %arg1: i32, %arg2: memref<1x8x32xf32, #tpu.memory_space<vmem>>, %arg3: memref<8x32xf32, #tpu.memory_space<vmem>>, %arg4: memref<1x2x32xf32, #tpu.memory_space<vmem>>, %arg5: memref<1x1x32xf32, #tpu.memory_space<vmem>>, %arg6: memref<1x1x32xf32, #tpu.memory_space<vmem>>, %arg7: memref<1x32x96xbf16, #tpu.memory_space<vmem>>, %arg8: memref<1x1x96xf32, #tpu.memory_space<vmem>>, %arg9: memref<1x32x32xbf16, #tpu.memory_space<vmem>>, %arg10: memref<1x1x32xf32, #tpu.memory_space<vmem>>, %arg11: memref<1x1x32xf32, #tpu.memory_space<vmem>>, %arg12: memref<1x1x32xf32, #tpu.memory_space<vmem>>, %arg13: memref<1x32x128xbf16, #tpu.memory_space<vmem>>, %arg14: memref<1x1x128xf32, #tpu.memory_space<vmem>>, %arg15: memref<1x128x32xbf16, #tpu.memory_space<vmem>>, %arg16: memref<1x1x32xf32, #tpu.memory_space<vmem>>, %arg17: memref<1x8x32xf32, #tpu.memory_space<vmem>>, %arg18: memref<8x8xf32, #tpu.memory_space<vmem>>) attributes {dimension_semantics = [#tpu.dimension_semantics<parallel>, #tpu.dimension_semantics<arbitrary>], iteration_bounds = array<i64: 2, 2>, scalar_prefetch = 0 : i64, scratch_operands = 1 : i64, tpu.core_type = #tpu.core_type<tc>, window_params = [{transform_indices = @transform_0, window_bounds = array<i64: 1, 8, 32>}, {pipeline_mode = #tpu.pipeline_mode<synchronous>, transform_indices = @transform_1, window_bounds = array<i64: 8, 32>}, {transform_indices = @transform_2, window_bounds = array<i64: 1, 2, 32>}, {transform_indices = @transform_3, window_bounds = array<i64: 1, 1, 32>}, {transform_indices = @transform_4, window_bounds = array<i64: 1, 1, 32>}, {transform_indices = @transform_5, window_bounds = array<i64: 1, 32, 96>}, {transform_indices = @transform_6, window_bounds = array<i64: 1, 1, 96>}, {transform_indices = @transform_7, window_bounds = array<i64: 1, 32, 32>}, {transform_indices = @transform_8, window_bounds = array<i64: 1, 1, 32>}, {transform_indices = @transform_9, window_bounds = array<i64: 1, 1, 32>}, {transform_indices = @transform_10, window_bounds = array<i64: 1, 1, 32>}, {transform_indices = @transform_11, window_bounds = array<i64: 1, 32, 128>}, {transform_indices = @transform_12, window_bounds = array<i64: 1, 1, 128>}, {transform_indices = @transform_13, window_bounds = array<i64: 1, 128, 32>}, {transform_indices = @transform_14, window_bounds = array<i64: 1, 1, 32>}, {transform_indices = @transform_15, window_bounds = array<i64: 1, 8, 32>}]} {
    %c0_i32 = arith.constant 0 : i32
    %0 = arith.cmpi eq, %arg1, %c0_i32 : i32
    %1 = arith.extui %0 : i1 to i32
    %c0_i32_0 = arith.constant 0 : i32
    %2 = arith.cmpi ne, %1, %c0_i32_0 : i32
    scf.if %2 {
      %c0_78 = arith.constant 0 : index
      %c0_79 = arith.constant 0 : index
      %c0_80 = arith.constant 0 : index
      %200 = vector.load %arg2[%c0_78, %c0_79, %c0_80] : memref<1x8x32xf32, #tpu.memory_space<vmem>>, vector<1x8x32xf32>
      %c0_81 = arith.constant 0 : index
      %c0_82 = arith.constant 0 : index
      %201 = vector.load %arg3[%c0_81, %c0_82] : memref<8x32xf32, #tpu.memory_space<vmem>>, vector<8x32xf32>
      %202 = vector.shape_cast %201 : vector<8x32xf32> to vector<1x8x32xf32>
      %203 = arith.addf %200, %202 : vector<1x8x32xf32>
      %c0_83 = arith.constant 0 : index
      %c0_84 = arith.constant 0 : index
      %c0_85 = arith.constant 0 : index
      %204 = vector.load %arg17[%c0_83, %c0_84, %c0_85] : memref<1x8x32xf32, #tpu.memory_space<vmem>>, vector<1x8x32xf32>
      tpu.vector_store %arg17[%c0_83, %c0_84, %c0_85], %203 {strides = array<i32>} : memref<1x8x32xf32, #tpu.memory_space<vmem>>, vector<1x8x32xf32>,
      %205 = tpu.iota {dimensions = array<i32: 0>} : vector<8x8xi32>
      %206 = tpu.iota {dimensions = array<i32: 1>} : vector<8x8xi32>
      %207 = arith.cmpi sle, %206, %205 : vector<8x8xi32>
      %cst_86 = arith.constant 0.000000e+00 : f32
      %cst_87 = arith.constant -1.000000e+30 : f32
      %208 = vector.broadcast %cst_86 : f32 to vector<8x8xf32>
      %209 = vector.broadcast %cst_87 : f32 to vector<8x8xf32>
      %210 = arith.select %207, %208, %209 : vector<8x8xi1>, vector<8x8xf32>
      %c0_88 = arith.constant 0 : index
      %c0_89 = arith.constant 0 : index
      %211 = vector.load %arg18[%c0_88, %c0_89] : memref<8x8xf32, #tpu.memory_space<vmem>>, vector<8x8xf32>
      tpu.vector_store %arg18[%c0_88, %c0_89], %210 {strides = array<i32>} : memref<8x8xf32, #tpu.memory_space<vmem>>, vector<8x8xf32>,
    } else {
    }
    %c1_i32 = arith.constant 1 : i32
    %3 = arith.cmpi sge, %arg1, %c1_i32 : i32
    %c1_i32_1 = arith.constant 1 : i32
    %4 = arith.cmpi sle, %arg1, %c1_i32_1 : i32
    %5 = arith.andi %3, %4 : i1
    %6 = arith.extui %5 : i1 to i32
    %c0_i32_2 = arith.constant 0 : i32
    %7 = arith.cmpi ne, %6, %c0_i32_2 : i32
    scf.if %7 {
      %c0_78 = arith.constant 0 : index
      %c0_79 = arith.constant 0 : index
      %c0_80 = arith.constant 0 : index
      %200 = vector.load %arg4[%c0_78, %c0_79, %c0_80] : memref<1x2x32xf32, #tpu.memory_space<vmem>>, vector<1x2x32xf32>
      %201 = vector.shape_cast %200 : vector<1x2x32xf32> to vector<2x32xf32>
      %202 = vector.shape_cast %201 : vector<2x32xf32> to vector<1x2x32xf32>
      %c0_81 = arith.constant 0 : index
      %c1 = arith.constant 1 : index
      %c0_82 = arith.constant 0 : index
      %203 = vector.load %arg17[%c0_81, %c1, %c0_82] : memref<1x8x32xf32, #tpu.memory_space<vmem>>, vector<1x2x32xf32>
      tpu.vector_store %arg17[%c0_81, %c1, %c0_82], %202 {strides = array<i32>} : memref<1x8x32xf32, #tpu.memory_space<vmem>>, vector<1x2x32xf32>,
    } else {
    }
    %c0 = arith.constant 0 : index
    %c0_3 = arith.constant 0 : index
    %c0_4 = arith.constant 0 : index
    %8 = vector.load %arg17[%c0, %c0_3, %c0_4] : memref<1x8x32xf32, #tpu.memory_space<vmem>>, vector<1x8x32xf32>
    %c0_5 = arith.constant 0 : index
    %c0_6 = arith.constant 0 : index
    %c0_7 = arith.constant 0 : index
    %9 = vector.load %arg5[%c0_5, %c0_6, %c0_7] : memref<1x1x32xf32, #tpu.memory_space<vmem>>, vector<1x1x32xf32>
    %10 = vector.shape_cast %9 : vector<1x1x32xf32> to vector<1x32xf32>
    %c0_8 = arith.constant 0 : index
    %c0_9 = arith.constant 0 : index
    %c0_10 = arith.constant 0 : index
    %11 = vector.load %arg6[%c0_8, %c0_9, %c0_10] : memref<1x1x32xf32, #tpu.memory_space<vmem>>, vector<1x1x32xf32>
    %12 = vector.shape_cast %11 : vector<1x1x32xf32> to vector<1x32xf32>
    %cst = arith.constant dense<0.000000e+00> : vector<1x8xf32>
    %13 = vector.multi_reduction <add>, %8, %cst [2] : vector<1x8x32xf32> to vector<1x8xf32>
    %14 = vector.shape_cast %13 : vector<1x8xf32> to vector<1x8x1xf32>
    %cst_11 = arith.constant 3.200000e+01 : f32
    %15 = vector.broadcast %cst_11 : f32 to vector<1x8x1xf32>
    %16 = arith.divf %14, %15 : vector<1x8x1xf32>
    %17 = vector.broadcast %16 : vector<1x8x1xf32> to vector<1x8x32xf32>
    %18 = arith.subf %8, %17 : vector<1x8x32xf32>
    %19 = arith.mulf %18, %18 : vector<1x8x32xf32>
    %cst_12 = arith.constant dense<0.000000e+00> : vector<1x8xf32>
    %20 = vector.multi_reduction <add>, %19, %cst_12 [2] : vector<1x8x32xf32> to vector<1x8xf32>
    %21 = vector.shape_cast %20 : vector<1x8xf32> to vector<1x8x1xf32>
    %cst_13 = arith.constant 3.200000e+01 : f32
    %22 = vector.broadcast %cst_13 : f32 to vector<1x8x1xf32>
    %23 = arith.divf %21, %22 : vector<1x8x1xf32>
    %24 = vector.broadcast %16 : vector<1x8x1xf32> to vector<1x8x32xf32>
    %25 = arith.subf %8, %24 : vector<1x8x32xf32>
    %cst_14 = arith.constant 9.99999974E-6 : f32
    %26 = vector.broadcast %cst_14 : f32 to vector<1x8x1xf32>
    %27 = arith.addf %23, %26 : vector<1x8x1xf32>
    %28 = math.rsqrt %27 : vector<1x8x1xf32>
    %29 = vector.broadcast %28 : vector<1x8x1xf32> to vector<1x8x32xf32>
    %30 = arith.mulf %25, %29 : vector<1x8x32xf32>
    %31 = vector.shape_cast %10 : vector<1x32xf32> to vector<1x1x32xf32>
    %32 = vector.broadcast %31 : vector<1x1x32xf32> to vector<1x8x32xf32>
    %33 = arith.mulf %30, %32 : vector<1x8x32xf32>
    %34 = vector.shape_cast %12 : vector<1x32xf32> to vector<1x1x32xf32>
    %35 = vector.broadcast %34 : vector<1x1x32xf32> to vector<1x8x32xf32>
    %36 = arith.addf %33, %35 : vector<1x8x32xf32>
    %37 = vector.shape_cast %36 : vector<1x8x32xf32> to vector<8x32xf32>
    %38 = arith.truncf %37 : vector<8x32xf32> to vector<8x32xbf16>
    %c0_15 = arith.constant 0 : index
    %c0_16 = arith.constant 0 : index
    %c0_17 = arith.constant 0 : index
    %39 = vector.load %arg7[%c0_15, %c0_16, %c0_17] : memref<1x32x96xbf16, #tpu.memory_space<vmem>>, vector<1x32x96xbf16>
    %40 = vector.shape_cast %39 : vector<1x32x96xbf16> to vector<32x96xbf16>
    %cst_18 = arith.constant dense<0.000000e+00> : vector<8x96xf32>
    %41 = tpu.matmul %38, %40, %cst_18 {dimension_numbers = #tpu.dot_dimension_numbers<[1], [0], [0], [1], [0, 0, 1, 1], [], []>} : vector<8x32xbf16>, vector<32x96xbf16>, vector<8x96xf32> -> vector<8x96xf32>
    %c0_19 = arith.constant 0 : index
    %c0_20 = arith.constant 0 : index
    %c0_21 = arith.constant 0 : index
    %42 = vector.load %arg8[%c0_19, %c0_20, %c0_21] : memref<1x1x96xf32, #tpu.memory_space<vmem>>, vector<1x1x96xf32>
    %43 = vector.shape_cast %42 : vector<1x1x96xf32> to vector<1x96xf32>
    %44 = vector.broadcast %43 : vector<1x96xf32> to vector<8x96xf32>
    %45 = arith.addf %41, %44 : vector<8x96xf32>
    %46 = vector.shape_cast %45 : vector<8x96xf32> to vector<1x8x96xf32>
    %47 = vector.extract_strided_slice %46 {offsets = [0, 0, 0], sizes = [1, 8, 8], strides = [1, 1, 1]} : vector<1x8x96xf32> to vector<1x8x8xf32>
    %cst_22 = arith.constant 0.353553385 : f32
    %48 = vector.broadcast %cst_22 : f32 to vector<1x8x8xf32>
    %49 = arith.mulf %47, %48 : vector<1x8x8xf32>
    %50 = vector.extract_strided_slice %46 {offsets = [0, 0, 8], sizes = [1, 8, 8], strides = [1, 1, 1]} : vector<1x8x96xf32> to vector<1x8x8xf32>
    %cst_23 = arith.constant 0.353553385 : f32
    %51 = vector.broadcast %cst_23 : f32 to vector<1x8x8xf32>
    %52 = arith.mulf %50, %51 : vector<1x8x8xf32>
    %53 = vector.extract_strided_slice %46 {offsets = [0, 0, 16], sizes = [1, 8, 8], strides = [1, 1, 1]} : vector<1x8x96xf32> to vector<1x8x8xf32>
    %cst_24 = arith.constant 0.353553385 : f32
    %54 = vector.broadcast %cst_24 : f32 to vector<1x8x8xf32>
    %55 = arith.mulf %53, %54 : vector<1x8x8xf32>
    %56 = vector.extract_strided_slice %46 {offsets = [0, 0, 24], sizes = [1, 8, 8], strides = [1, 1, 1]} : vector<1x8x96xf32> to vector<1x8x8xf32>
    %cst_25 = arith.constant 0.353553385 : f32
    %57 = vector.broadcast %cst_25 : f32 to vector<1x8x8xf32>
    %58 = arith.mulf %56, %57 : vector<1x8x8xf32>
    %59 = vector.shape_cast %49 : vector<1x8x8xf32> to vector<1x1x8x8xf32>
    %60 = vector.shape_cast %52 : vector<1x8x8xf32> to vector<1x1x8x8xf32>
    %61 = vector.shape_cast %55 : vector<1x8x8xf32> to vector<1x1x8x8xf32>
    %62 = vector.shape_cast %58 : vector<1x8x8xf32> to vector<1x1x8x8xf32>
    %63 = tpu.concatenate %59, %60, %61, %62 in 0 : vector<1x1x8x8xf32>, vector<1x1x8x8xf32>, vector<1x1x8x8xf32>, vector<1x1x8x8xf32> -> vector<4x1x8x8xf32>
    %64 = vector.shape_cast %63 : vector<4x1x8x8xf32> to vector<4x8x8xf32>
    %65 = arith.truncf %64 : vector<4x8x8xf32> to vector<4x8x8xbf16>
    %66 = vector.extract_strided_slice %46 {offsets = [0, 0, 32], sizes = [1, 8, 8], strides = [1, 1, 1]} : vector<1x8x96xf32> to vector<1x8x8xf32>
    %cst_26 = arith.constant 1.000000e+00 : f32
    %67 = vector.broadcast %cst_26 : f32 to vector<1x8x8xf32>
    %68 = arith.mulf %66, %67 : vector<1x8x8xf32>
    %69 = vector.extract_strided_slice %46 {offsets = [0, 0, 40], sizes = [1, 8, 8], strides = [1, 1, 1]} : vector<1x8x96xf32> to vector<1x8x8xf32>
    %cst_27 = arith.constant 1.000000e+00 : f32
    %70 = vector.broadcast %cst_27 : f32 to vector<1x8x8xf32>
    %71 = arith.mulf %69, %70 : vector<1x8x8xf32>
    %72 = vector.extract_strided_slice %46 {offsets = [0, 0, 48], sizes = [1, 8, 8], strides = [1, 1, 1]} : vector<1x8x96xf32> to vector<1x8x8xf32>
    %cst_28 = arith.constant 1.000000e+00 : f32
    %73 = vector.broadcast %cst_28 : f32 to vector<1x8x8xf32>
    %74 = arith.mulf %72, %73 : vector<1x8x8xf32>
    %75 = vector.extract_strided_slice %46 {offsets = [0, 0, 56], sizes = [1, 8, 8], strides = [1, 1, 1]} : vector<1x8x96xf32> to vector<1x8x8xf32>
    %cst_29 = arith.constant 1.000000e+00 : f32
    %76 = vector.broadcast %cst_29 : f32 to vector<1x8x8xf32>
    %77 = arith.mulf %75, %76 : vector<1x8x8xf32>
    %78 = vector.shape_cast %68 : vector<1x8x8xf32> to vector<1x1x8x8xf32>
    %79 = vector.shape_cast %71 : vector<1x8x8xf32> to vector<1x1x8x8xf32>
    %80 = vector.shape_cast %74 : vector<1x8x8xf32> to vector<1x1x8x8xf32>
    %81 = vector.shape_cast %77 : vector<1x8x8xf32> to vector<1x1x8x8xf32>
    %82 = tpu.concatenate %78, %79, %80, %81 in 0 : vector<1x1x8x8xf32>, vector<1x1x8x8xf32>, vector<1x1x8x8xf32>, vector<1x1x8x8xf32> -> vector<4x1x8x8xf32>
    %83 = vector.shape_cast %82 : vector<4x1x8x8xf32> to vector<4x8x8xf32>
    %84 = arith.truncf %83 : vector<4x8x8xf32> to vector<4x8x8xbf16>
    %85 = vector.extract_strided_slice %46 {offsets = [0, 0, 64], sizes = [1, 8, 8], strides = [1, 1, 1]} : vector<1x8x96xf32> to vector<1x8x8xf32>
    %cst_30 = arith.constant 1.000000e+00 : f32
    %86 = vector.broadcast %cst_30 : f32 to vector<1x8x8xf32>
    %87 = arith.mulf %85, %86 : vector<1x8x8xf32>
    %88 = vector.extract_strided_slice %46 {offsets = [0, 0, 72], sizes = [1, 8, 8], strides = [1, 1, 1]} : vector<1x8x96xf32> to vector<1x8x8xf32>
    %cst_31 = arith.constant 1.000000e+00 : f32
    %89 = vector.broadcast %cst_31 : f32 to vector<1x8x8xf32>
    %90 = arith.mulf %88, %89 : vector<1x8x8xf32>
    %91 = vector.extract_strided_slice %46 {offsets = [0, 0, 80], sizes = [1, 8, 8], strides = [1, 1, 1]} : vector<1x8x96xf32> to vector<1x8x8xf32>
    %cst_32 = arith.constant 1.000000e+00 : f32
    %92 = vector.broadcast %cst_32 : f32 to vector<1x8x8xf32>
    %93 = arith.mulf %91, %92 : vector<1x8x8xf32>
    %94 = vector.extract_strided_slice %46 {offsets = [0, 0, 88], sizes = [1, 8, 8], strides = [1, 1, 1]} : vector<1x8x96xf32> to vector<1x8x8xf32>
    %cst_33 = arith.constant 1.000000e+00 : f32
    %95 = vector.broadcast %cst_33 : f32 to vector<1x8x8xf32>
    %96 = arith.mulf %94, %95 : vector<1x8x8xf32>
    %97 = vector.shape_cast %87 : vector<1x8x8xf32> to vector<1x1x8x8xf32>
    %98 = vector.shape_cast %90 : vector<1x8x8xf32> to vector<1x1x8x8xf32>
    %99 = vector.shape_cast %93 : vector<1x8x8xf32> to vector<1x1x8x8xf32>
    %100 = vector.shape_cast %96 : vector<1x8x8xf32> to vector<1x1x8x8xf32>
    %101 = tpu.concatenate %97, %98, %99, %100 in 0 : vector<1x1x8x8xf32>, vector<1x1x8x8xf32>, vector<1x1x8x8xf32>, vector<1x1x8x8xf32> -> vector<4x1x8x8xf32>
    %102 = vector.shape_cast %101 : vector<4x1x8x8xf32> to vector<4x8x8xf32>
    %103 = arith.truncf %102 : vector<4x8x8xf32> to vector<4x8x8xbf16>
    "tpu.trace_start"() <{level = 10 : i32, message = "bqd,bkd->bqk"}> : () -> ()
    %cst_34 = arith.constant dense<0.000000e+00> : vector<4x8x8xf32>
    %104 = tpu.matmul %65, %84, %cst_34 {dimension_numbers = #tpu.dot_dimension_numbers<[2], [2], [1], [1], [0, 0, 0, 1, 1, 1], [0], [0]>} : vector<4x8x8xbf16>, vector<4x8x8xbf16>, vector<4x8x8xf32> -> vector<4x8x8xf32>
    "tpu.trace_stop"() : () -> ()
    %c0_35 = arith.constant 0 : index
    %c0_36 = arith.constant 0 : index
    %105 = vector.load %arg18[%c0_35, %c0_36] : memref<8x8xf32, #tpu.memory_space<vmem>>, vector<8x8xf32>
    %106 = vector.shape_cast %105 : vector<8x8xf32> to vector<1x8x8xf32>
    %107 = vector.broadcast %106 : vector<1x8x8xf32> to vector<4x8x8xf32>
    %108 = arith.addf %104, %107 : vector<4x8x8xf32>
    %cst_37 = arith.constant dense<0xFF800000> : vector<4x8xf32>
    %109 = vector.multi_reduction <maximumf>, %108, %cst_37 [2] : vector<4x8x8xf32> to vector<4x8xf32>
    %110 = vector.shape_cast %109 : vector<4x8xf32> to vector<4x8x1xf32>
    %111 = vector.broadcast %110 : vector<4x8x1xf32> to vector<4x8x8xf32>
    %112 = arith.subf %108, %111 : vector<4x8x8xf32>
    %113 = math.exp %112 : vector<4x8x8xf32>
    %cst_38 = arith.constant dense<0.000000e+00> : vector<4x8xf32>
    %114 = vector.multi_reduction <add>, %113, %cst_38 [2] : vector<4x8x8xf32> to vector<4x8xf32>
    %115 = vector.shape_cast %114 : vector<4x8xf32> to vector<4x8x1xf32>
    %116 = tpu.reciprocal %115 {approx = true} : vector<4x8x1xf32> -> vector<4x8x1xf32>
    %117 = vector.broadcast %116 : vector<4x8x1xf32> to vector<4x8x8xf32>
    %118 = arith.mulf %113, %117 : vector<4x8x8xf32>
    %119 = arith.truncf %118 : vector<4x8x8xf32> to vector<4x8x8xbf16>
    "tpu.trace_start"() <{level = 10 : i32, message = "bqk,bkd->bqd"}> : () -> ()
    %cst_39 = arith.constant dense<0.000000e+00> : vector<4x8x8xf32>
    %120 = tpu.matmul %119, %103, %cst_39 {dimension_numbers = #tpu.dot_dimension_numbers<[2], [1], [1], [2], [0, 0, 0, 1, 1, 2], [0], [0]>} : vector<4x8x8xbf16>, vector<4x8x8xbf16>, vector<4x8x8xf32> -> vector<4x8x8xf32>
    "tpu.trace_stop"() : () -> ()
    %121 = vector.shape_cast %120 : vector<4x8x8xf32> to vector<4x1x8x8xf32>
    %122 = vector.extract_strided_slice %121 {offsets = [0, 0, 0, 0], sizes = [1, 1, 8, 8], strides = [1, 1, 1, 1]} : vector<4x1x8x8xf32> to vector<1x1x8x8xf32>
    %123 = vector.shape_cast %122 : vector<1x1x8x8xf32> to vector<1x8x8xf32>
    %124 = vector.extract_strided_slice %121 {offsets = [1, 0, 0, 0], sizes = [1, 1, 8, 8], strides = [1, 1, 1, 1]} : vector<4x1x8x8xf32> to vector<1x1x8x8xf32>
    %125 = vector.shape_cast %124 : vector<1x1x8x8xf32> to vector<1x8x8xf32>
    %126 = vector.extract_strided_slice %121 {offsets = [2, 0, 0, 0], sizes = [1, 1, 8, 8], strides = [1, 1, 1, 1]} : vector<4x1x8x8xf32> to vector<1x1x8x8xf32>
    %127 = vector.shape_cast %126 : vector<1x1x8x8xf32> to vector<1x8x8xf32>
    %128 = vector.extract_strided_slice %121 {offsets = [3, 0, 0, 0], sizes = [1, 1, 8, 8], strides = [1, 1, 1, 1]} : vector<4x1x8x8xf32> to vector<1x1x8x8xf32>
    %129 = vector.shape_cast %128 : vector<1x1x8x8xf32> to vector<1x8x8xf32>
    %130 = tpu.concatenate %123, %125, %127, %129 in 2 : vector<1x8x8xf32>, vector<1x8x8xf32>, vector<1x8x8xf32>, vector<1x8x8xf32> -> vector<1x8x32xf32>
    %131 = vector.shape_cast %130 : vector<1x8x32xf32> to vector<8x32xf32>
    %132 = arith.truncf %131 : vector<8x32xf32> to vector<8x32xbf16>
    %c0_40 = arith.constant 0 : index
    %c0_41 = arith.constant 0 : index
    %c0_42 = arith.constant 0 : index
    %133 = vector.load %arg9[%c0_40, %c0_41, %c0_42] : memref<1x32x32xbf16, #tpu.memory_space<vmem>>, vector<1x32x32xbf16>
    %134 = vector.shape_cast %133 : vector<1x32x32xbf16> to vector<32x32xbf16>
    %cst_43 = arith.constant dense<0.000000e+00> : vector<8x32xf32>
    %135 = tpu.matmul %132, %134, %cst_43 {dimension_numbers = #tpu.dot_dimension_numbers<[1], [0], [0], [1], [0, 0, 1, 1], [], []>} : vector<8x32xbf16>, vector<32x32xbf16>, vector<8x32xf32> -> vector<8x32xf32>
    %c0_44 = arith.constant 0 : index
    %c0_45 = arith.constant 0 : index
    %c0_46 = arith.constant 0 : index
    %136 = vector.load %arg10[%c0_44, %c0_45, %c0_46] : memref<1x1x32xf32, #tpu.memory_space<vmem>>, vector<1x1x32xf32>
    %137 = vector.shape_cast %136 : vector<1x1x32xf32> to vector<1x32xf32>
    %138 = vector.broadcast %137 : vector<1x32xf32> to vector<8x32xf32>
    %139 = arith.addf %135, %138 : vector<8x32xf32>
    %140 = vector.shape_cast %139 : vector<8x32xf32> to vector<1x8x32xf32>
    %141 = arith.addf %8, %140 : vector<1x8x32xf32>
    %c0_47 = arith.constant 0 : index
    %c0_48 = arith.constant 0 : index
    %c0_49 = arith.constant 0 : index
    %142 = vector.load %arg11[%c0_47, %c0_48, %c0_49] : memref<1x1x32xf32, #tpu.memory_space<vmem>>, vector<1x1x32xf32>
    %143 = vector.shape_cast %142 : vector<1x1x32xf32> to vector<1x32xf32>
    %c0_50 = arith.constant 0 : index
    %c0_51 = arith.constant 0 : index
    %c0_52 = arith.constant 0 : index
    %144 = vector.load %arg12[%c0_50, %c0_51, %c0_52] : memref<1x1x32xf32, #tpu.memory_space<vmem>>, vector<1x1x32xf32>
    %145 = vector.shape_cast %144 : vector<1x1x32xf32> to vector<1x32xf32>
    %cst_53 = arith.constant dense<0.000000e+00> : vector<1x8xf32>
    %146 = vector.multi_reduction <add>, %141, %cst_53 [2] : vector<1x8x32xf32> to vector<1x8xf32>
    %147 = vector.shape_cast %146 : vector<1x8xf32> to vector<1x8x1xf32>
    %cst_54 = arith.constant 3.200000e+01 : f32
    %148 = vector.broadcast %cst_54 : f32 to vector<1x8x1xf32>
    %149 = arith.divf %147, %148 : vector<1x8x1xf32>
    %150 = vector.broadcast %149 : vector<1x8x1xf32> to vector<1x8x32xf32>
    %151 = arith.subf %141, %150 : vector<1x8x32xf32>
    %152 = arith.mulf %151, %151 : vector<1x8x32xf32>
    %cst_55 = arith.constant dense<0.000000e+00> : vector<1x8xf32>
    %153 = vector.multi_reduction <add>, %152, %cst_55 [2] : vector<1x8x32xf32> to vector<1x8xf32>
    %154 = vector.shape_cast %153 : vector<1x8xf32> to vector<1x8x1xf32>
    %cst_56 = arith.constant 3.200000e+01 : f32
    %155 = vector.broadcast %cst_56 : f32 to vector<1x8x1xf32>
    %156 = arith.divf %154, %155 : vector<1x8x1xf32>
    %157 = vector.broadcast %149 : vector<1x8x1xf32> to vector<1x8x32xf32>
    %158 = arith.subf %141, %157 : vector<1x8x32xf32>
    %cst_57 = arith.constant 9.99999974E-6 : f32
    %159 = vector.broadcast %cst_57 : f32 to vector<1x8x1xf32>
    %160 = arith.addf %156, %159 : vector<1x8x1xf32>
    %161 = math.rsqrt %160 : vector<1x8x1xf32>
    %162 = vector.broadcast %161 : vector<1x8x1xf32> to vector<1x8x32xf32>
    %163 = arith.mulf %158, %162 : vector<1x8x32xf32>
    %164 = vector.shape_cast %143 : vector<1x32xf32> to vector<1x1x32xf32>
    %165 = vector.broadcast %164 : vector<1x1x32xf32> to vector<1x8x32xf32>
    %166 = arith.mulf %163, %165 : vector<1x8x32xf32>
    %167 = vector.shape_cast %145 : vector<1x32xf32> to vector<1x1x32xf32>
    %168 = vector.broadcast %167 : vector<1x1x32xf32> to vector<1x8x32xf32>
    %169 = arith.addf %166, %168 : vector<1x8x32xf32>
    %170 = vector.shape_cast %169 : vector<1x8x32xf32> to vector<8x32xf32>
    %171 = arith.truncf %170 : vector<8x32xf32> to vector<8x32xbf16>
    %cst_58 = arith.constant 0.000000e+00 : f32
    %172 = vector.broadcast %cst_58 : f32 to vector<8x32xf32>
    %c0_59 = arith.constant 0 : index
    %c0_60 = arith.constant 0 : index
    %c0_61 = arith.constant 0 : index
    %173 = vector.load %arg13[%c0_59, %c0_60, %c0_61] : memref<1x32x128xbf16, #tpu.memory_space<vmem>>, vector<1x32x128xbf16>
    %174 = vector.shape_cast %173 : vector<1x32x128xbf16> to vector<32x128xbf16>
    %cst_62 = arith.constant dense<0.000000e+00> : vector<8x128xf32>
    %175 = tpu.matmul %171, %174, %cst_62 {dimension_numbers = #tpu.dot_dimension_numbers<[1], [0], [0], [1], [0, 0, 1, 1], [], []>} : vector<8x32xbf16>, vector<32x128xbf16>, vector<8x128xf32> -> vector<8x128xf32>
    %c0_63 = arith.constant 0 : index
    %c0_64 = arith.constant 0 : index
    %c0_65 = arith.constant 0 : index
    %176 = vector.load %arg14[%c0_63, %c0_64, %c0_65] : memref<1x1x128xf32, #tpu.memory_space<vmem>>, vector<1x1x128xf32>
    %177 = vector.shape_cast %176 : vector<1x1x128xf32> to vector<1x128xf32>
    %178 = vector.broadcast %177 : vector<1x128xf32> to vector<8x128xf32>
    %179 = arith.addf %175, %178 : vector<8x128xf32>
    %cst_66 = arith.constant 1.702000e+00 : f32
    %180 = vector.broadcast %cst_66 : f32 to vector<8x128xf32>
    %181 = arith.mulf %180, %179 : vector<8x128xf32>
    %182 = arith.negf %181 : vector<8x128xf32>
    %183 = math.exp %182 : vector<8x128xf32>
    %cst_67 = arith.constant 1.000000e+00 : f32
    %184 = vector.broadcast %cst_67 : f32 to vector<8x128xf32>
    %185 = arith.addf %184, %183 : vector<8x128xf32>
    %186 = arith.divf %184, %185 : vector<8x128xf32>
    %187 = arith.mulf %179, %186 : vector<8x128xf32>
    %188 = arith.truncf %187 : vector<8x128xf32> to vector<8x128xbf16>
    %c0_68 = arith.constant 0 : index
    %c0_69 = arith.constant 0 : index
    %c0_70 = arith.constant 0 : index
    %189 = vector.load %arg15[%c0_68, %c0_69, %c0_70] : memref<1x128x32xbf16, #tpu.memory_space<vmem>>, vector<1x128x32xbf16>
    %190 = vector.shape_cast %189 : vector<1x128x32xbf16> to vector<128x32xbf16>
    %cst_71 = arith.constant dense<0.000000e+00> : vector<8x32xf32>
    %191 = tpu.matmul %188, %190, %cst_71 {dimension_numbers = #tpu.dot_dimension_numbers<[1], [0], [0], [1], [0, 0, 1, 1], [], []>} : vector<8x128xbf16>, vector<128x32xbf16>, vector<8x32xf32> -> vector<8x32xf32>
    %192 = arith.addf %172, %191 : vector<8x32xf32>
    %c0_72 = arith.constant 0 : index
    %c0_73 = arith.constant 0 : index
    %c0_74 = arith.constant 0 : index
    %193 = vector.load %arg16[%c0_72, %c0_73, %c0_74] : memref<1x1x32xf32, #tpu.memory_space<vmem>>, vector<1x1x32xf32>
    %194 = vector.shape_cast %193 : vector<1x1x32xf32> to vector<1x32xf32>
    %195 = vector.broadcast %194 : vector<1x32xf32> to vector<8x32xf32>
    %196 = arith.addf %192, %195 : vector<8x32xf32>
    %197 = vector.shape_cast %196 : vector<8x32xf32> to vector<1x8x32xf32>
    %198 = arith.addf %141, %197 : vector<1x8x32xf32>
    %c0_75 = arith.constant 0 : index
    %c0_76 = arith.constant 0 : index
    %c0_77 = arith.constant 0 : index
    %199 = vector.load %arg17[%c0_75, %c0_76, %c0_77] : memref<1x8x32xf32, #tpu.memory_space<vmem>>, vector<1x8x32xf32>
    tpu.vector_store %arg17[%c0_75, %c0_76, %c0_77], %198 {strides = array<i32>} : memref<1x8x32xf32, #tpu.memory_space<vmem>>, vector<1x8x32xf32>,
    return
  }
  func.func @transform_0(%arg0: i32, %arg1: i32) -> (i32, i32, i32) {
    %c0_i32 = arith.constant 0 : i32
    %c0_i32_0 = arith.constant 0 : i32
    %c0_i32_1 = arith.constant 0 : i32
    return %arg0, %c0_i32, %c0_i32_0 : i32, i32, i32
  }
  func.func @transform_1(%arg0: i32, %arg1: i32) -> (i32, i32) {
    %c0_i32 = arith.constant 0 : i32
    %c0_i32_0 = arith.constant 0 : i32
    %c0_i32_1 = arith.constant 0 : i32
    return %c0_i32, %c0_i32_0 : i32, i32
  }
  func.func @transform_2(%arg0: i32, %arg1: i32) -> (i32, i32, i32) {
    %c1_i32 = arith.constant 1 : i32
    %0 = arith.subi %arg1, %c1_i32 : i32
    %c0_i32 = arith.constant 0 : i32
    %c0_i32_0 = arith.constant 0 : i32
    %1 = arith.maxsi %c0_i32, %0 : i32
    %2 = arith.minsi %c0_i32_0, %1 : i32
    %c0_i32_1 = arith.constant 0 : i32
    %c0_i32_2 = arith.constant 0 : i32
    %c0_i32_3 = arith.constant 0 : i32
    return %2, %c0_i32_1, %c0_i32_2 : i32, i32, i32
  }
  func.func @transform_3(%arg0: i32, %arg1: i32) -> (i32, i32, i32) {
    %c0_i32 = arith.constant 0 : i32
    %c0_i32_0 = arith.constant 0 : i32
    %c0_i32_1 = arith.constant 0 : i32
    return %arg1, %c0_i32, %c0_i32_0 : i32, i32, i32
  }
  func.func @transform_4(%arg0: i32, %arg1: i32) -> (i32, i32, i32) {
    %c0_i32 = arith.constant 0 : i32
    %c0_i32_0 = arith.constant 0 : i32
    %c0_i32_1 = arith.constant 0 : i32
    return %arg1, %c0_i32, %c0_i32_0 : i32, i32, i32
  }
  func.func @transform_5(%arg0: i32, %arg1: i32) -> (i32, i32, i32) {
    %c0_i32 = arith.constant 0 : i32
    %c0_i32_0 = arith.constant 0 : i32
    %c0_i32_1 = arith.constant 0 : i32
    return %arg1, %c0_i32, %c0_i32_0 : i32, i32, i32
  }
  func.func @transform_6(%arg0: i32, %arg1: i32) -> (i32, i32, i32) {
    %c0_i32 = arith.constant 0 : i32
    %c0_i32_0 = arith.constant 0 : i32
    %c0_i32_1 = arith.constant 0 : i32
    return %arg1, %c0_i32, %c0_i32_0 : i32, i32, i32
  }
  func.func @transform_7(%arg0: i32, %arg1: i32) -> (i32, i32, i32) {
    %c0_i32 = arith.constant 0 : i32
    %c0_i32_0 = arith.constant 0 : i32
    %c0_i32_1 = arith.constant 0 : i32
    return %arg1, %c0_i32, %c0_i32_0 : i32, i32, i32
  }
  func.func @transform_8(%arg0: i32, %arg1: i32) -> (i32, i32, i32) {
    %c0_i32 = arith.constant 0 : i32
    %c0_i32_0 = arith.constant 0 : i32
    %c0_i32_1 = arith.constant 0 : i32
    return %arg1, %c0_i32, %c0_i32_0 : i32, i32, i32
  }
  func.func @transform_9(%arg0: i32, %arg1: i32) -> (i32, i32, i32) {
    %c0_i32 = arith.constant 0 : i32
    %c0_i32_0 = arith.constant 0 : i32
    %c0_i32_1 = arith.constant 0 : i32
    return %arg1, %c0_i32, %c0_i32_0 : i32, i32, i32
  }
  func.func @transform_10(%arg0: i32, %arg1: i32) -> (i32, i32, i32) {
    %c0_i32 = arith.constant 0 : i32
    %c0_i32_0 = arith.constant 0 : i32
    %c0_i32_1 = arith.constant 0 : i32
    return %arg1, %c0_i32, %c0_i32_0 : i32, i32, i32
  }
  func.func @transform_11(%arg0: i32, %arg1: i32) -> (i32, i32, i32) {
    %c0_i32 = arith.constant 0 : i32
    %c0_i32_0 = arith.constant 0 : i32
    %c0_i32_1 = arith.constant 0 : i32
    return %arg1, %c0_i32, %c0_i32_0 : i32, i32, i32
  }
  func.func @transform_12(%arg0: i32, %arg1: i32) -> (i32, i32, i32) {
    %c0_i32 = arith.constant 0 : i32
    %c0_i32_0 = arith.constant 0 : i32
    %c0_i32_1 = arith.constant 0 : i32
    return %arg1, %c0_i32, %c0_i32_0 : i32, i32, i32
  }
  func.func @transform_13(%arg0: i32, %arg1: i32) -> (i32, i32, i32) {
    %c0_i32 = arith.constant 0 : i32
    %c0_i32_0 = arith.constant 0 : i32
    %c0_i32_1 = arith.constant 0 : i32
    return %arg1, %c0_i32, %c0_i32_0 : i32, i32, i32
  }
  func.func @transform_14(%arg0: i32, %arg1: i32) -> (i32, i32, i32) {
    %c0_i32 = arith.constant 0 : i32
    %c0_i32_0 = arith.constant 0 : i32
    %c0_i32_1 = arith.constant 0 : i32
    return %arg1, %c0_i32, %c0_i32_0 : i32, i32, i32
  }
  func.func @transform_15(%arg0: i32, %arg1: i32) -> (i32, i32, i32) {
    %c0_i32 = arith.constant 0 : i32
    %c0_i32_0 = arith.constant 0 : i32
    %c0_i32_1 = arith.constant 0 : i32
    return %arg0, %c0_i32, %c0_i32_0 : i32, i32, i32
  }
}

</mosaic_0001>

<llo_original>
// kernel: tpu_custom_call.1
$region0: #{tpu_custom_call.1}
  #allocation0 [shape = 'u32[]', space=smem, size = 0x4, offset = 0x4, fixed_abs, tag = 'smem constant byte address 0x4 - core index']
  #allocation1 [shape = 'u32[144,128]{1,0:T(1,128)}', space=vmem, size = 0x12000, scoped, tag = 'internal scratch']
  #allocation2 [shape = 'f32[8,8]{1,0:T(8,128)}', space=vmem, size = 0x1000, scoped, tag = 'scratch operand']
  %s0 = inlined_call_operand.vmem [shape: f32[2,8,32], index: 0, kind: input, shape index: {}]
  %s1 = inlined_call_operand.vmem [shape: f32[8,32], index: 1, kind: input, shape index: {}]
  %s2 = inlined_call_operand.vmem [shape: f32[1,2,32], index: 2, kind: input, shape index: {}]
  %s3 = inlined_call_operand.vmem [shape: f32[2,1,32], index: 3, kind: input, shape index: {}]
  %s4 = inlined_call_operand.vmem [shape: f32[2,1,32], index: 4, kind: input, shape index: {}]
  %s5 = inlined_call_operand.vmem [shape: bf16[2,32,96], index: 5, kind: input, shape index: {}]
  %s6 = inlined_call_operand.vmem [shape: f32[2,1,96], index: 6, kind: input, shape index: {}]
  %s7 = inlined_call_operand.vmem [shape: bf16[2,32,32], index: 7, kind: input, shape index: {}]
  %s8 = inlined_call_operand.vmem [shape: f32[2,1,32], index: 8, kind: input, shape index: {}]
  %s9 = inlined_call_operand.vmem [shape: f32[2,1,32], index: 9, kind: input, shape index: {}]
  %s10 = inlined_call_operand.vmem [shape: f32[2,1,32], index: 10, kind: input, shape index: {}]
  %s11 = inlined_call_operand.vmem [shape: bf16[2,32,128], index: 11, kind: input, shape index: {}]
  %s12 = inlined_call_operand.vmem [shape: f32[2,1,128], index: 12, kind: input, shape index: {}]
  %s13 = inlined_call_operand.vmem [shape: bf16[2,128,32], index: 13, kind: input, shape index: {}]
  %s14 = inlined_call_operand.vmem [shape: f32[2,1,32], index: 14, kind: input, shape index: {}]
  %s15 = inlined_call_operand.hbm [shape: f32[2,8,32], index: 15, kind: output, shape index: {}]
  %s16 = sld [smem:[#allocation0]]
  $region101: #{tpu_custom_call.1} parent=0
    _
  %s18 = ssub.s32 1, %s16
  %s19 = scalar_select 0, %s18, %s16
  $region1: #{tpu_custom_call.1} parent=0
    #allocation3 [shape = 'u8[8192]{0}', space=vmem, size = 0x2000, scoped, tag = 'output window, operand 0']
    #allocation4 [shape = 's32[2]{0}', space=sflag, size = 0x8, scoped, tag = 'scoped memory for tpu_custom_call.1']
    %20 = vsyncpa [#allocation4], 0
    %s21 = scalar_lea.sflag [#allocation4], 1
    %22 = vsyncpa %s21, 0
    loop: start=0, step=1, limit=6
    $region2: #{tpu_custom_call.1} parent=1 // loop_pre_header
      _
    $region3: #{tpu_custom_call.1} parent=1 // loop_header
      %s24 = sphi 0, %s28
      %p25 = scmp.ge.s32.totalorder %s24, 6
      %s31 = sphi 0, %s43
      %s32 = sphi 0, %s39
      %s33 = sphi 0, %s31
      %s34 = sphi 0, %s32
      %s35 = sphi 0, %s33
      %s36 = sphi 0, %s34
      %s46 = sphi 0, %s48
      %s49 = sphi 0, %s46
      %s50 = sphi 0, %s49
      %s66 = sphi 0, %s50
      %s70 = sphi 0, %s70
      %s72 = sphi 0, %s70
      %s73 = sphi 0, %s72
      %s87 = sphi 0, %s73
      %s103 = sphi 0, %s105
      %s106 = sphi 0, %s103
      %s107 = sphi 0, %s106
      %s123 = sphi 0, %s107
      %s129 = sphi 0, %s131
      %s132 = sphi 0, %s129
      %s133 = sphi 0, %s132
      %s149 = sphi 0, %s133
      %s155 = sphi 0, %s157
      %s158 = sphi 0, %s155
      %s159 = sphi 0, %s158
      %s175 = sphi 0, %s159
      %s181 = sphi 0, %s183
      %s184 = sphi 0, %s181
      %s185 = sphi 0, %s184
      %s201 = sphi 0, %s185
      %s207 = sphi 0, %s209
      %s210 = sphi 0, %s207
      %s211 = sphi 0, %s210
      %s227 = sphi 0, %s211
      %s233 = sphi 0, %s235
      %s236 = sphi 0, %s233
      %s237 = sphi 0, %s236
      %s253 = sphi 0, %s237
      %s259 = sphi 0, %s261
      %s262 = sphi 0, %s259
      %s263 = sphi 0, %s262
      %s279 = sphi 0, %s263
      %s285 = sphi 0, %s287
      %s288 = sphi 0, %s285
      %s289 = sphi 0, %s288
      %s305 = sphi 0, %s289
      %s311 = sphi 0, %s313
      %s314 = sphi 0, %s311
      %s315 = sphi 0, %s314
      %s331 = sphi 0, %s315
      %s337 = sphi 0, %s339
      %s340 = sphi 0, %s337
      %s341 = sphi 0, %s340
      %s357 = sphi 0, %s341
      %s363 = sphi 0, %s365
      %s366 = sphi 0, %s363
      %s367 = sphi 0, %s366
      %s383 = sphi 0, %s367
      %s389 = sphi 0, %s391
      %s392 = sphi 0, %s389
      %s393 = sphi 0, %s392
      %s409 = sphi 0, %s393
      %s415 = sphi 0, %s417
      %s418 = sphi 0, %s415
      %s419 = sphi 0, %s418
      %s435 = sphi 0, %s419
      %s441 = sphi 0, %s443
      %s444 = sphi 0, %s441
      %s445 = sphi 0, %s444
      %s461 = sphi 0, %s445
    $region4: #{tpu_custom_call.1} parent=1 // loop_header_branch
      %27 = sbr.rel (%p25) target = $region8
    $region5: #{tpu_custom_call.1} parent=1 // loop_body
      %s29 = ssub.s32 %s24, 1
      %s30 = ssub.s32 %s24, 2
      %s37 = sadd.s32 1, %s32
      %p38 = scmp.ge.s32.totalorder %s37, 2
      %s39 = scalar_select %p38, 0, %s37
      %s40 = sadd.s32 1, %s31
      %s41 = scalar_select %p38, %s40, %s31
      %p42 = scmp.ge.s32.totalorder %s41, 2
      %s43 = scalar_select %p42, 0, %s41
      %s44 = ssub.s32 %s31, %s43
      %p45 = scmp.eq.s32.totalorder %s44, 0
      %s47 = sadd.s32 %s46, 1
      %s48 = scalar_select %p45, %s46, %s47
      %p51 = pneg %p45
      %p52 = scmp.eq.s32.totalorder %s24, 3
      %p53 = por %p51, %p52
      %p54 = scmp.ne.s32.totalorder %s46, %s49
      %p55 = scmp.eq.s32.totalorder %s24, 0
      %p56 = por %p54, %p55
      %p57 = scmp.ne.s32.totalorder %s46, %s49
      %p58 = scmp.eq.s32.totalorder %s29, 3
      %p59 = por %p57, %p58
      %p60 = scmp.ne.s32.totalorder %s49, %s50
      %p61 = scmp.eq.s32.totalorder %s29, 0
      %p62 = por %p60, %p61
      %p63 = scmp.ne.s32.totalorder %s49, %s50
      %p64 = scmp.eq.s32.totalorder %s30, 3
      %p65 = por %p63, %p64
      %p67 = scmp.ne.s32.totalorder %s50, %s66
      %p68 = scmp.eq.s32.totalorder %s30, 0
      %p69 = por %p67, %p68
      %s71 = sadd.s32 %s70, 1
      %p74 = scmp.eq.s32.totalorder %s24, 3
      %p75 = scmp.ne.s32.totalorder %s70, %s72
      %p76 = scmp.eq.s32.totalorder %s24, 0
      %p77 = por %p75, %p76
      %p78 = scmp.ne.s32.totalorder %s70, %s72
      %p79 = scmp.eq.s32.totalorder %s29, 3
      %p80 = por %p78, %p79
      %p81 = scmp.ne.s32.totalorder %s72, %s73
      %p82 = scmp.eq.s32.totalorder %s29, 0
      %p83 = por %p81, %p82
      %p84 = scmp.ne.s32.totalorder %s72, %s73
      %p85 = scmp.eq.s32.totalorder %s30, 3
      %p86 = por %p84, %p85
      %p88 = scmp.ne.s32.totalorder %s73, %s87
      %p89 = scmp.eq.s32.totalorder %s30, 0
      %p90 = por %p88, %p89
      %s91 = ssub.s32 %s32, 1
      %p92 = scmp.gt.s32.totalorder %s91, 0
      %s93 = scalar_select %p92, %s91, 0
      %p94 = scmp.lt.s32.totalorder %s93, 0
      %s95 = scalar_select %p94, %s93, 0
      %s96 = ssub.s32 %s39, 1
      %p97 = scmp.gt.s32.totalorder %s96, 0
      %s98 = scalar_select %p97, %s96, 0
      %p99 = scmp.lt.s32.totalorder %s98, 0
      %s100 = scalar_select %p99, %s98, 0
      %s101 = ssub.s32 %s95, %s100
      %p102 = scmp.eq.s32.totalorder %s101, 0
      %s104 = sadd.s32 %s103, 1
      %s105 = scalar_select %p102, %s103, %s104
      %p108 = pneg %p102
      %p109 = scmp.eq.s32.totalorder %s24, 3
      %p110 = por %p108, %p109
      %p111 = scmp.ne.s32.totalorder %s103, %s106
      %p112 = scmp.eq.s32.totalorder %s24, 0
      %p113 = por %p111, %p112
      %p114 = scmp.ne.s32.totalorder %s103, %s106
      %p115 = scmp.eq.s32.totalorder %s29, 3
      %p116 = por %p114, %p115
      %p117 = scmp.ne.s32.totalorder %s106, %s107
      %p118 = scmp.eq.s32.totalorder %s29, 0
      %p119 = por %p117, %p118
      %p120 = scmp.ne.s32.totalorder %s106, %s107
      %p121 = scmp.eq.s32.totalorder %s30, 3
      %p122 = por %p120, %p121
      %p124 = scmp.ne.s32.totalorder %s107, %s123
      %p125 = scmp.eq.s32.totalorder %s30, 0
      %p126 = por %p124, %p125
      %s127 = ssub.s32 %s32, %s39
      %p128 = scmp.eq.s32.totalorder %s127, 0
      %s130 = sadd.s32 %s129, 1
      %s131 = scalar_select %p128, %s129, %s130
      %p134 = pneg %p128
      %p135 = scmp.eq.s32.totalorder %s24, 3
      %p136 = por %p134, %p135
      %p137 = scmp.ne.s32.totalorder %s129, %s132
      %p138 = scmp.eq.s32.totalorder %s24, 0
      %p139 = por %p137, %p138
      %p140 = scmp.ne.s32.totalorder %s129, %s132
      %p141 = scmp.eq.s32.totalorder %s29, 3
      %p142 = por %p140, %p141
      %p143 = scmp.ne.s32.totalorder %s132, %s133
      %p144 = scmp.eq.s32.totalorder %s29, 0
      %p145 = por %p143, %p144
      %p146 = scmp.ne.s32.totalorder %s132, %s133
      %p147 = scmp.eq.s32.totalorder %s30, 3
      %p148 = por %p146, %p147
      %p150 = scmp.ne.s32.totalorder %s133, %s149
      %p151 = scmp.eq.s32.totalorder %s30, 0
      %p152 = por %p150, %p151
      %s153 = ssub.s32 %s32, %s39
      %p154 = scmp.eq.s32.totalorder %s153, 0
      %s156 = sadd.s32 %s155, 1
      %s157 = scalar_select %p154, %s155, %s156
      %p160 = pneg %p154
      %p161 = scmp.eq.s32.totalorder %s24, 3
      %p162 = por %p160, %p161
      %p163 = scmp.ne.s32.totalorder %s155, %s158
      %p164 = scmp.eq.s32.totalorder %s24, 0
      %p165 = por %p163, %p164
      %p166 = scmp.ne.s32.totalorder %s155, %s158
      %p167 = scmp.eq.s32.totalorder %s29, 3
      %p168 = por %p166, %p167
      %p169 = scmp.ne.s32.totalorder %s158, %s159
      %p170 = scmp.eq.s32.totalorder %s29, 0
      %p171 = por %p169, %p170
      %p172 = scmp.ne.s32.totalorder %s158, %s159
      %p173 = scmp.eq.s32.totalorder %s30, 3
      %p174 = por %p172, %p173
      %p176 = scmp.ne.s32.totalorder %s159, %s175
      %p177 = scmp.eq.s32.totalorder %s30, 0
      %p178 = por %p176, %p177
      %s179 = ssub.s32 %s32, %s39
      %p180 = scmp.eq.s32.totalorder %s179, 0
      %s182 = sadd.s32 %s181, 1
      %s183 = scalar_select %p180, %s181, %s182
      %p186 = pneg %p180
      %p187 = scmp.eq.s32.totalorder %s24, 3
      %p188 = por %p186, %p187
      %p189 = scmp.ne.s32.totalorder %s181, %s184
      %p190 = scmp.eq.s32.totalorder %s24, 0
      %p191 = por %p189, %p190
      %p192 = scmp.ne.s32.totalorder %s181, %s184
      %p193 = scmp.eq.s32.totalorder %s29, 3
      %p194 = por %p192, %p193
      %p195 = scmp.ne.s32.totalorder %s184, %s185
      %p196 = scmp.eq.s32.totalorder %s29, 0
      %p197 = por %p195, %p196
      %p198 = scmp.ne.s32.totalorder %s184, %s185
      %p199 = scmp.eq.s32.totalorder %s30, 3
      %p200 = por %p198, %p199
      %p202 = scmp.ne.s32.totalorder %s185, %s201
      %p203 = scmp.eq.s32.totalorder %s30, 0
      %p204 = por %p202, %p203
      %s205 = ssub.s32 %s32, %s39
      %p206 = scmp.eq.s32.totalorder %s205, 0
      %s208 = sadd.s32 %s207, 1
      %s209 = scalar_select %p206, %s207, %s208
      %p212 = pneg %p206
      %p213 = scmp.eq.s32.totalorder %s24, 3
      %p214 = por %p212, %p213
      %p215 = scmp.ne.s32.totalorder %s207, %s210
      %p216 = scmp.eq.s32.totalorder %s24, 0
      %p217 = por %p215, %p216
      %p218 = scmp.ne.s32.totalorder %s207, %s210
      %p219 = scmp.eq.s32.totalorder %s29, 3
      %p220 = por %p218, %p219
      %p221 = scmp.ne.s32.totalorder %s210, %s211
      %p222 = scmp.eq.s32.totalorder %s29, 0
      %p223 = por %p221, %p222
      %p224 = scmp.ne.s32.totalorder %s210, %s211
      %p225 = scmp.eq.s32.totalorder %s30, 3
      %p226 = por %p224, %p225
      %p228 = scmp.ne.s32.totalorder %s211, %s227
      %p229 = scmp.eq.s32.totalorder %s30, 0
      %p230 = por %p228, %p229
      %s231 = ssub.s32 %s32, %s39
      %p232 = scmp.eq.s32.totalorder %s231, 0
      %s234 = sadd.s32 %s233, 1
      %s235 = scalar_select %p232, %s233, %s234
      %p238 = pneg %p232
      %p239 = scmp.eq.s32.totalorder %s24, 3
      %p240 = por %p238, %p239
      %p241 = scmp.ne.s32.totalorder %s233, %s236
      %p242 = scmp.eq.s32.totalorder %s24, 0
      %p243 = por %p241, %p242
      %p244 = scmp.ne.s32.totalorder %s233, %s236
      %p245 = scmp.eq.s32.totalorder %s29, 3
      %p246 = por %p244, %p245
      %p247 = scmp.ne.s32.totalorder %s236, %s237
      %p248 = scmp.eq.s32.totalorder %s29, 0
      %p249 = por %p247, %p248
      %p250 = scmp.ne.s32.totalorder %s236, %s237
      %p251 = scmp.eq.s32.totalorder %s30, 3
      %p252 = por %p250, %p251
      %p254 = scmp.ne.s32.totalorder %s237, %s253
      %p255 = scmp.eq.s32.totalorder %s30, 0
      %p256 = por %p254, %p255
      %s257 = ssub.s32 %s32, %s39
      %p258 = scmp.eq.s32.totalorder %s257, 0
      %s260 = sadd.s32 %s259, 1
      %s261 = scalar_select %p258, %s259, %s260
      %p264 = pneg %p258
      %p265 = scmp.eq.s32.totalorder %s24, 3
      %p266 = por %p264, %p265
      %p267 = scmp.ne.s32.totalorder %s259, %s262
      %p268 = scmp.eq.s32.totalorder %s24, 0
      %p269 = por %p267, %p268
      %p270 = scmp.ne.s32.totalorder %s259, %s262
      %p271 = scmp.eq.s32.totalorder %s29, 3
      %p272 = por %p270, %p271
      %p273 = scmp.ne.s32.totalorder %s262, %s263
      %p274 = scmp.eq.s32.totalorder %s29, 0
      %p275 = por %p273, %p274
      %p276 = scmp.ne.s32.totalorder %s262, %s263
      %p277 = scmp.eq.s32.totalorder %s30, 3
      %p278 = por %p276, %p277
      %p280 = scmp.ne.s32.totalorder %s263, %s279
      %p281 = scmp.eq.s32.totalorder %s30, 0
      %p282 = por %p280, %p281
      %s283 = ssub.s32 %s32, %s39
      %p284 = scmp.eq.s32.totalorder %s283, 0
      %s286 = sadd.s32 %s285, 1
      %s287 = scalar_select %p284, %s285, %s286
      %p290 = pneg %p284
      %p291 = scmp.eq.s32.totalorder %s24, 3
      %p292 = por %p290, %p291
      %p293 = scmp.ne.s32.totalorder %s285, %s288
      %p294 = scmp.eq.s32.totalorder %s24, 0
      %p295 = por %p293, %p294
      %p296 = scmp.ne.s32.totalorder %s285, %s288
      %p297 = scmp.eq.s32.totalorder %s29, 3
      %p298 = por %p296, %p297
      %p299 = scmp.ne.s32.totalorder %s288, %s289
      %p300 = scmp.eq.s32.totalorder %s29, 0
      %p301 = por %p299, %p300
      %p302 = scmp.ne.s32.totalorder %s288, %s289
      %p303 = scmp.eq.s32.totalorder %s30, 3
      %p304 = por %p302, %p303
      %p306 = scmp.ne.s32.totalorder %s289, %s305
      %p307 = scmp.eq.s32.totalorder %s30, 0
      %p308 = por %p306, %p307
      %s309 = ssub.s32 %s32, %s39
      %p310 = scmp.eq.s32.totalorder %s309, 0
      %s312 = sadd.s32 %s311, 1
      %s313 = scalar_select %p310, %s311, %s312
      %p316 = pneg %p310
      %p317 = scmp.eq.s32.totalorder %s24, 3
      %p318 = por %p316, %p317
      %p319 = scmp.ne.s32.totalorder %s311, %s314
      %p320 = scmp.eq.s32.totalorder %s24, 0
      %p321 = por %p319, %p320
      %p322 = scmp.ne.s32.totalorder %s311, %s314
      %p323 = scmp.eq.s32.totalorder %s29, 3
      %p324 = por %p322, %p323
      %p325 = scmp.ne.s32.totalorder %s314, %s315
      %p326 = scmp.eq.s32.totalorder %s29, 0
      %p327 = por %p325, %p326
      %p328 = scmp.ne.s32.totalorder %s314, %s315
      %p329 = scmp.eq.s32.totalorder %s30, 3
      %p330 = por %p328, %p329
      %p332 = scmp.ne.s32.totalorder %s315, %s331
      %p333 = scmp.eq.s32.totalorder %s30, 0
      %p334 = por %p332, %p333
      %s335 = ssub.s32 %s32, %s39
      %p336 = scmp.eq.s32.totalorder %s335, 0
      %s338 = sadd.s32 %s337, 1
      %s339 = scalar_select %p336, %s337, %s338
      %p342 = pneg %p336
      %p343 = scmp.eq.s32.totalorder %s24, 3
      %p344 = por %p342, %p343
      %p345 = scmp.ne.s32.totalorder %s337, %s340
      %p346 = scmp.eq.s32.totalorder %s24, 0
      %p347 = por %p345, %p346
      %p348 = scmp.ne.s32.totalorder %s337, %s340
      %p349 = scmp.eq.s32.totalorder %s29, 3
      %p350 = por %p348, %p349
      %p351 = scmp.ne.s32.totalorder %s340, %s341
      %p352 = scmp.eq.s32.totalorder %s29, 0
      %p353 = por %p351, %p352
      %p354 = scmp.ne.s32.totalorder %s340, %s341
      %p355 = scmp.eq.s32.totalorder %s30, 3
      %p356 = por %p354, %p355
      %p358 = scmp.ne.s32.totalorder %s341, %s357
      %p359 = scmp.eq.s32.totalorder %s30, 0
      %p360 = por %p358, %p359
      %s361 = ssub.s32 %s32, %s39
      %p362 = scmp.eq.s32.totalorder %s361, 0
      %s364 = sadd.s32 %s363, 1
      %s365 = scalar_select %p362, %s363, %s364
      %p368 = pneg %p362
      %p369 = scmp.eq.s32.totalorder %s24, 3
      %p370 = por %p368, %p369
      %p371 = scmp.ne.s32.totalorder %s363, %s366
      %p372 = scmp.eq.s32.totalorder %s24, 0
      %p373 = por %p371, %p372
      %p374 = scmp.ne.s32.totalorder %s363, %s366
      %p375 = scmp.eq.s32.totalorder %s29, 3
      %p376 = por %p374, %p375
      %p377 = scmp.ne.s32.totalorder %s366, %s367
      %p378 = scmp.eq.s32.totalorder %s29, 0
      %p379 = por %p377, %p378
      %p380 = scmp.ne.s32.totalorder %s366, %s367
      %p381 = scmp.eq.s32.totalorder %s30, 3
      %p382 = por %p380, %p381
      %p384 = scmp.ne.s32.totalorder %s367, %s383
      %p385 = scmp.eq.s32.totalorder %s30, 0
      %p386 = por %p384, %p385
      %s387 = ssub.s32 %s32, %s39
      %p388 = scmp.eq.s32.totalorder %s387, 0
      %s390 = sadd.s32 %s389, 1
      %s391 = scalar_select %p388, %s389, %s390
      %p394 = pneg %p388
      %p395 = scmp.eq.s32.totalorder %s24, 3
      %p396 = por %p394, %p395
      %p397 = scmp.ne.s32.totalorder %s389, %s392
      %p398 = scmp.eq.s32.totalorder %s24, 0
      %p399 = por %p397, %p398
      %p400 = scmp.ne.s32.totalorder %s389, %s392
      %p401 = scmp.eq.s32.totalorder %s29, 3
      %p402 = por %p400, %p401
      %p403 = scmp.ne.s32.totalorder %s392, %s393
      %p404 = scmp.eq.s32.totalorder %s29, 0
      %p405 = por %p403, %p404
      %p406 = scmp.ne.s32.totalorder %s392, %s393
      %p407 = scmp.eq.s32.totalorder %s30, 3
      %p408 = por %p406, %p407
      %p410 = scmp.ne.s32.totalorder %s393, %s409
      %p411 = scmp.eq.s32.totalorder %s30, 0
      %p412 = por %p410, %p411
      %s413 = ssub.s32 %s32, %s39
      %p414 = scmp.eq.s32.totalorder %s413, 0
      %s416 = sadd.s32 %s415, 1
      %s417 = scalar_select %p414, %s415, %s416
      %p420 = pneg %p414
      %p421 = scmp.eq.s32.totalorder %s24, 3
      %p422 = por %p420, %p421
      %p423 = scmp.ne.s32.totalorder %s415, %s418
      %p424 = scmp.eq.s32.totalorder %s24, 0
      %p425 = por %p423, %p424
      %p426 = scmp.ne.s32.totalorder %s415, %s418
      %p427 = scmp.eq.s32.totalorder %s29, 3
      %p428 = por %p426, %p427
      %p429 = scmp.ne.s32.totalorder %s418, %s419
      %p430 = scmp.eq.s32.totalorder %s29, 0
      %p431 = por %p429, %p430
      %p432 = scmp.ne.s32.totalorder %s418, %s419
      %p433 = scmp.eq.s32.totalorder %s30, 3
      %p434 = por %p432, %p433
      %p436 = scmp.ne.s32.totalorder %s419, %s435
      %p437 = scmp.eq.s32.totalorder %s30, 0
      %p438 = por %p436, %p437
      %s439 = ssub.s32 %s31, %s43
      %p440 = scmp.eq.s32.totalorder %s439, 0
      %s442 = sadd.s32 %s441, 1
      %s443 = scalar_select %p440, %s441, %s442
      %p446 = pneg %p440
      %p447 = scmp.eq.s32.totalorder %s24, 3
      %p448 = por %p446, %p447
      %p449 = scmp.ne.s32.totalorder %s441, %s444
      %p450 = scmp.eq.s32.totalorder %s24, 0
      %p451 = por %p449, %p450
      %p452 = scmp.ne.s32.totalorder %s441, %s444
      %p453 = scmp.eq.s32.totalorder %s29, 3
      %p454 = por %p452, %p453
      %p455 = scmp.ne.s32.totalorder %s444, %s445
      %p456 = scmp.eq.s32.totalorder %s29, 0
      %p457 = por %p455, %p456
      %p458 = scmp.ne.s32.totalorder %s444, %s445
      %p459 = scmp.eq.s32.totalorder %s30, 3
      %p460 = por %p458, %p459
      %p462 = scmp.ne.s32.totalorder %s445, %s461
      %p463 = scmp.eq.s32.totalorder %s30, 0
      %p464 = por %p462, %p463
      %p465 = scmp.le.s32.totalorder 1, %s24
      %p466 = scmp.lt.s32.totalorder %s24, 5
      %p467 = pnand %p465, %p466
      %p468 = pneg %p467
      // Predicated region
      $region9: #{tpu_custom_call.1} parent=5 // pred_check
        _
      $region10: #{tpu_custom_call.1} parent=5 // pred_check_branch
        %470 = sbr.rel (%p467) target = $region12
      $region11: #{tpu_custom_call.1} parent=5 // pred_region
        %s471 = ssub.s32 %s24, 1
        // Predicated region
        $region13: #{tpu_custom_call.1} parent=11 // pred_check
          %p472 = pneg %p83
        $region14: #{tpu_custom_call.1} parent=11 // pred_check_branch
          %474 = sbr.rel (%p472) target = $region16
        $region15: #{tpu_custom_call.1} parent=11 // pred_region
          _
        $region16: #{tpu_custom_call.1} parent=11 // pred_fallthru
          _
      $region12: #{tpu_custom_call.1} parent=5 // pred_fallthru
        _
      %p475 = scmp.lt.s32.totalorder %s24, 4
      // Predicated region
      $region17: #{tpu_custom_call.1} parent=5 // pred_check
        %p476 = pneg %p475
      $region18: #{tpu_custom_call.1} parent=5 // pred_check_branch
        %478 = sbr.rel (%p476) target = $region20
      $region19: #{tpu_custom_call.1} parent=5 // pred_region
        // Predicated region
        $region21: #{tpu_custom_call.1} parent=19 // pred_check
          %p479 = pneg %p56
        $region22: #{tpu_custom_call.1} parent=19 // pred_check_branch
          %481 = sbr.rel (%p479) target = $region24
        $region23: #{tpu_custom_call.1} parent=19 // pred_region
          %p482 = scmp.lt.s32.totalorder %s31, 1
          %s483 = scalar_select %p482, %s31, 1
          %s484 = smul.addr %s483, 8
          %s485 = scalar_lea.vmem %s0, %s484
        $region24: #{tpu_custom_call.1} parent=19 // pred_fallthru
          _
        // Predicated region
        $region25: #{tpu_custom_call.1} parent=19 // pred_check
          %p486 = pneg %p113
        $region26: #{tpu_custom_call.1} parent=19 // pred_check_branch
          %488 = sbr.rel (%p486) target = $region28
        $region27: #{tpu_custom_call.1} parent=19 // pred_region
          %s489 = ssub.s32 %s32, 1
          %p490 = scmp.gt.s32.totalorder %s489, 0
          %s491 = scalar_select %p490, %s489, 0
          %p492 = scmp.lt.s32.totalorder %s491, 0
          %s493 = scalar_select %p492, %s491, 0
          %p494 = scmp.lt.s32.totalorder %s493, 0
          %s495 = scalar_select %p494, %s493, 0
          %s496 = smul.addr %s495, 2
          %s497 = scalar_lea.vmem %s2, %s496
          %s498 = ssub.s32 %s32, 1
          %p499 = scmp.gt.s32.totalorder %s498, 0
          %s500 = scalar_select %p499, %s498, 0
          %p501 = scmp.lt.s32.totalorder %s500, 0
          %s502 = scalar_select %p501, %s500, 0
        $region28: #{tpu_custom_call.1} parent=19 // pred_fallthru
          _
        // Predicated region
        $region29: #{tpu_custom_call.1} parent=19 // pred_check
          %p503 = pneg %p139
        $region30: #{tpu_custom_call.1} parent=19 // pred_check_branch
          %505 = sbr.rel (%p503) target = $region32
        $region31: #{tpu_custom_call.1} parent=19 // pred_region
          %p506 = scmp.lt.s32.totalorder %s32, 1
          %s507 = scalar_select %p506, %s32, 1
          %s508 = scalar_lea.vmem %s3, %s507
        $region32: #{tpu_custom_call.1} parent=19 // pred_fallthru
          _
        // Predicated region
        $region33: #{tpu_custom_call.1} parent=19 // pred_check
          %p509 = pneg %p165
        $region34: #{tpu_custom_call.1} parent=19 // pred_check_branch
          %511 = sbr.rel (%p509) target = $region36
        $region35: #{tpu_custom_call.1} parent=19 // pred_region
          %p512 = scmp.lt.s32.totalorder %s32, 1
          %s513 = scalar_select %p512, %s32, 1
          %s514 = scalar_lea.vmem %s4, %s513
        $region36: #{tpu_custom_call.1} parent=19 // pred_fallthru
          _
        // Predicated region
        $region37: #{tpu_custom_call.1} parent=19 // pred_check
          %p515 = pneg %p191
        $region38: #{tpu_custom_call.1} parent=19 // pred_check_branch
          %517 = sbr.rel (%p515) target = $region40
        $region39: #{tpu_custom_call.1} parent=19 // pred_region
          %p518 = scmp.lt.s32.totalorder %s32, 1
          %s519 = scalar_select %p518, %s32, 1
          %s520 = smul.addr %s519, 4
          %s521 = smul.addr %s520, 4
          %s522 = scalar_lea.vmem %s5, %s521
        $region40: #{tpu_custom_call.1} parent=19 // pred_fallthru
          _
        // Predicated region
        $region41: #{tpu_custom_call.1} parent=19 // pred_check
          %p523 = pneg %p217
        $region42: #{tpu_custom_call.1} parent=19 // pred_check_branch
          %525 = sbr.rel (%p523) target = $region44
        $region43: #{tpu_custom_call.1} parent=19 // pred_region
          %p526 = scmp.lt.s32.totalorder %s32, 1
          %s527 = scalar_select %p526, %s32, 1
          %s528 = scalar_lea.vmem %s6, %s527
        $region44: #{tpu_custom_call.1} parent=19 // pred_fallthru
          _
        // Predicated region
        $region45: #{tpu_custom_call.1} parent=19 // pred_check
          %p529 = pneg %p243
        $region46: #{tpu_custom_call.1} parent=19 // pred_check_branch
          %531 = sbr.rel (%p529) target = $region48
        $region47: #{tpu_custom_call.1} parent=19 // pred_region
          %p532 = scmp.lt.s32.totalorder %s32, 1
          %s533 = scalar_select %p532, %s32, 1
          %s534 = smul.addr %s533, 4
          %s535 = smul.addr %s534, 4
          %s536 = scalar_lea.vmem %s7, %s535
        $region48: #{tpu_custom_call.1} parent=19 // pred_fallthru
          _
        // Predicated region
        $region49: #{tpu_custom_call.1} parent=19 // pred_check
          %p537 = pneg %p269
        $region50: #{tpu_custom_call.1} parent=19 // pred_check_branch
          %539 = sbr.rel (%p537) target = $region52
        $region51: #{tpu_custom_call.1} parent=19 // pred_region
          %p540 = scmp.lt.s32.totalorder %s32, 1
          %s541 = scalar_select %p540, %s32, 1
          %s542 = scalar_lea.vmem %s8, %s541
        $region52: #{tpu_custom_call.1} parent=19 // pred_fallthru
          _
        // Predicated region
        $region53: #{tpu_custom_call.1} parent=19 // pred_check
          %p543 = pneg %p295
        $region54: #{tpu_custom_call.1} parent=19 // pred_check_branch
          %545 = sbr.rel (%p543) target = $region56
        $region55: #{tpu_custom_call.1} parent=19 // pred_region
          %p546 = scmp.lt.s32.totalorder %s32, 1
          %s547 = scalar_select %p546, %s32, 1
          %s548 = scalar_lea.vmem %s9, %s547
        $region56: #{tpu_custom_call.1} parent=19 // pred_fallthru
          _
        // Predicated region
        $region57: #{tpu_custom_call.1} parent=19 // pred_check
          %p549 = pneg %p321
        $region58: #{tpu_custom_call.1} parent=19 // pred_check_branch
          %551 = sbr.rel (%p549) target = $region60
        $region59: #{tpu_custom_call.1} parent=19 // pred_region
          %p552 = scmp.lt.s32.totalorder %s32, 1
          %s553 = scalar_select %p552, %s32, 1
          %s554 = scalar_lea.vmem %s10, %s553
        $region60: #{tpu_custom_call.1} parent=19 // pred_fallthru
          _
        // Predicated region
        $region61: #{tpu_custom_call.1} parent=19 // pred_check
          %p555 = pneg %p347
        $region62: #{tpu_custom_call.1} parent=19 // pred_check_branch
          %557 = sbr.rel (%p555) target = $region64
        $region63: #{tpu_custom_call.1} parent=19 // pred_region
          %p558 = scmp.lt.s32.totalorder %s32, 1
          %s559 = scalar_select %p558, %s32, 1
          %s560 = smul.addr %s559, 4
          %s561 = smul.addr %s560, 4
          %s562 = scalar_lea.vmem %s11, %s561
        $region64: #{tpu_custom_call.1} parent=19 // pred_fallthru
          _
        // Predicated region
        $region65: #{tpu_custom_call.1} parent=19 // pred_check
          %p563 = pneg %p373
        $region66: #{tpu_custom_call.1} parent=19 // pred_check_branch
          %565 = sbr.rel (%p563) target = $region68
        $region67: #{tpu_custom_call.1} parent=19 // pred_region
          %p566 = scmp.lt.s32.totalorder %s32, 1
          %s567 = scalar_select %p566, %s32, 1
          %s568 = scalar_lea.vmem %s12, %s567
        $region68: #{tpu_custom_call.1} parent=19 // pred_fallthru
          _
        // Predicated region
        $region69: #{tpu_custom_call.1} parent=19 // pred_check
          %p569 = pneg %p399
        $region70: #{tpu_custom_call.1} parent=19 // pred_check_branch
          %571 = sbr.rel (%p569) target = $region72
        $region71: #{tpu_custom_call.1} parent=19 // pred_region
          %p572 = scmp.lt.s32.totalorder %s32, 1
          %s573 = scalar_select %p572, %s32, 1
          %s574 = smul.addr %s573, 16
          %s575 = smul.addr %s574, 4
          %s576 = scalar_lea.vmem %s13, %s575
        $region72: #{tpu_custom_call.1} parent=19 // pred_fallthru
          _
        // Predicated region
        $region73: #{tpu_custom_call.1} parent=19 // pred_check
          %p577 = pneg %p425
        $region74: #{tpu_custom_call.1} parent=19 // pred_check_branch
          %579 = sbr.rel (%p577) target = $region76
        $region75: #{tpu_custom_call.1} parent=19 // pred_region
          %p580 = scmp.lt.s32.totalorder %s32, 1
          %s581 = scalar_select %p580, %s32, 1
          %s582 = scalar_lea.vmem %s14, %s581
        $region76: #{tpu_custom_call.1} parent=19 // pred_fallthru
          _
      $region20: #{tpu_custom_call.1} parent=5 // pred_fallthru
        _
      %p583 = scmp.le.s32.totalorder 1, %s24
      %p584 = scmp.lt.s32.totalorder %s24, 5
      %p585 = pnand %p583, %p584
      %p586 = pneg %p585
      // Predicated region
      $region77: #{tpu_custom_call.1} parent=5 // pred_check
        _
      $region78: #{tpu_custom_call.1} parent=5 // pred_check_branch
        %588 = sbr.rel (%p585) target = $region80
      $region79: #{tpu_custom_call.1} parent=5 // pred_region
        %s589 = ssub.s32 %s24, 1
        %p590 = scmp.lt.s32.totalorder %s33, 1
        %s591 = scalar_select %p590, %s33, 1
        %s592 = smul.addr %s591, 8
        %s593 = scalar_lea.vmem %s0, %s592
        %p594 = pneg %p62
        %p595 = pneg %p59
        %p596 = pneg %p83
        %p597 = pneg %p80
        %s598 = ssub.s32 %s34, 1
        %p599 = scmp.gt.s32.totalorder %s598, 0
        %s600 = scalar_select %p599, %s598, 0
        %p601 = scmp.lt.s32.totalorder %s600, 0
        %s602 = scalar_select %p601, %s600, 0
        %p603 = scmp.lt.s32.totalorder %s602, 0
        %s604 = scalar_select %p603, %s602, 0
        %s605 = smul.addr %s604, 2
        %s606 = scalar_lea.vmem %s2, %s605
        %p607 = pneg %p119
        %p608 = pneg %p116
        %p609 = scmp.lt.s32.totalorder %s34, 1
        %s610 = scalar_select %p609, %s34, 1
        %s611 = scalar_lea.vmem %s3, %s610
        %p612 = pneg %p145
        %p613 = pneg %p142
        %p614 = scmp.lt.s32.totalorder %s34, 1
        %s615 = scalar_select %p614, %s34, 1
        %s616 = scalar_lea.vmem %s4, %s615
        %p617 = pneg %p171
        %p618 = pneg %p168
        %p619 = scmp.lt.s32.totalorder %s34, 1
        %s620 = scalar_select %p619, %s34, 1
        %s621 = smul.addr %s620, 4
        %s622 = smul.addr %s621, 4
        %s623 = scalar_lea.vmem %s5, %s622
        %p624 = pneg %p197
        %p625 = pneg %p194
        %p626 = scmp.lt.s32.totalorder %s34, 1
        %s627 = scalar_select %p626, %s34, 1
        %s628 = scalar_lea.vmem %s6, %s627
        %p629 = pneg %p223
        %p630 = pneg %p220
        %p631 = scmp.lt.s32.totalorder %s34, 1
        %s632 = scalar_select %p631, %s34, 1
        %s633 = smul.addr %s632, 4
        %s634 = smul.addr %s633, 4
        %s635 = scalar_lea.vmem %s7, %s634
        %p636 = pneg %p249
        %p637 = pneg %p246
        %p638 = scmp.lt.s32.totalorder %s34, 1
        %s639 = scalar_select %p638, %s34, 1
        %s640 = scalar_lea.vmem %s8, %s639
        %p641 = pneg %p275
        %p642 = pneg %p272
        %p643 = scmp.lt.s32.totalorder %s34, 1
        %s644 = scalar_select %p643, %s34, 1
        %s645 = scalar_lea.vmem %s9, %s644
        %p646 = pneg %p301
        %p647 = pneg %p298
        %p648 = scmp.lt.s32.totalorder %s34, 1
        %s649 = scalar_select %p648, %s34, 1
        %s650 = scalar_lea.vmem %s10, %s649
        %p651 = pneg %p327
        %p652 = pneg %p324
        %p653 = scmp.lt.s32.totalorder %s34, 1
        %s654 = scalar_select %p653, %s34, 1
        %s655 = smul.addr %s654, 4
        %s656 = smul.addr %s655, 4
        %s657 = scalar_lea.vmem %s11, %s656
        %p658 = pneg %p353
        %p659 = pneg %p350
        %p660 = scmp.lt.s32.totalorder %s34, 1
        %s661 = scalar_select %p660, %s34, 1
        %s662 = scalar_lea.vmem %s12, %s661
        %p663 = pneg %p379
        %p664 = pneg %p376
        %p665 = scmp.lt.s32.totalorder %s34, 1
        %s666 = scalar_select %p665, %s34, 1
        %s667 = smul.addr %s666, 16
        %s668 = smul.addr %s667, 4
        %s669 = scalar_lea.vmem %s13, %s668
        %p670 = pneg %p405
        %p671 = pneg %p402
        %p672 = scmp.lt.s32.totalorder %s34, 1
        %s673 = scalar_select %p672, %s34, 1
        %s674 = scalar_lea.vmem %s14, %s673
        %p675 = pneg %p431
        %p676 = pneg %p428
        %p677 = pneg %p457
        %p678 = pneg %p454
        %s679 = sand.u32 %s444, 1
        %s680 = scalar_lea.sflag [#allocation4], %s679
        %s681 = sand.u32 %s444, 1
        %s682 = smul.addr %s681, 8
        %s683 = scalar_lea.vmem [#allocation3], %s682
        %p684 = scmp.lt.s32.totalorder %s33, 1
        %s685 = scalar_select %p684, %s33, 1
        %s686 = smul.addr %s685, 8
        %s687 = scalar_lea.vmem %s0, %s686
        %s688 = ssub.s32 %s34, 1
        %p689 = scmp.gt.s32.totalorder %s688, 0
        %s690 = scalar_select %p689, %s688, 0
        %p691 = scmp.lt.s32.totalorder %s690, 0
        %s692 = scalar_select %p691, %s690, 0
        %p693 = scmp.lt.s32.totalorder %s692, 0
        %s694 = scalar_select %p693, %s692, 0
        %s695 = smul.addr %s694, 2
        %s696 = scalar_lea.vmem %s2, %s695
        %s697 = ssub.s32 %s34, 1
        %p698 = scmp.gt.s32.totalorder %s697, 0
        %s699 = scalar_select %p698, %s697, 0
        %p700 = scmp.lt.s32.totalorder %s699, 0
        %s701 = scalar_select %p700, %s699, 0
        %p702 = scmp.lt.s32.totalorder %s34, 1
        %s703 = scalar_select %p702, %s34, 1
        %s704 = scalar_lea.vmem %s3, %s703
        %p705 = scmp.lt.s32.totalorder %s34, 1
        %s706 = scalar_select %p705, %s34, 1
        %s707 = scalar_lea.vmem %s4, %s706
        %p708 = scmp.lt.s32.totalorder %s34, 1
        %s709 = scalar_select %p708, %s34, 1
        %s710 = smul.addr %s709, 4
        %s711 = smul.addr %s710, 4
        %s712 = scalar_lea.vmem %s5, %s711
        %p713 = scmp.lt.s32.totalorder %s34, 1
        %s714 = scalar_select %p713, %s34, 1
        %s715 = scalar_lea.vmem %s6, %s714
        %p716 = scmp.lt.s32.totalorder %s34, 1
        %s717 = scalar_select %p716, %s34, 1
        %s718 = smul.addr %s717, 4
        %s719 = smul.addr %s718, 4
        %s720 = scalar_lea.vmem %s7, %s719
        %p721 = scmp.lt.s32.totalorder %s34, 1
        %s722 = scalar_select %p721, %s34, 1
        %s723 = scalar_lea.vmem %s8, %s722
        %p724 = scmp.lt.s32.totalorder %s34, 1
        %s725 = scalar_select %p724, %s34, 1
        %s726 = scalar_lea.vmem %s9, %s725
        %p727 = scmp.lt.s32.totalorder %s34, 1
        %s728 = scalar_select %p727, %s34, 1
        %s729 = scalar_lea.vmem %s10, %s728
        %p730 = scmp.lt.s32.totalorder %s34, 1
        %s731 = scalar_select %p730, %s34, 1
        %s732 = smul.addr %s731, 4
        %s733 = smul.addr %s732, 4
        %s734 = scalar_lea.vmem %s11, %s733
        %p735 = scmp.lt.s32.totalorder %s34, 1
        %s736 = scalar_select %p735, %s34, 1
        %s737 = scalar_lea.vmem %s12, %s736
        %p738 = scmp.lt.s32.totalorder %s34, 1
        %s739 = scalar_select %p738, %s34, 1
        %s740 = smul.addr %s739, 16
        %s741 = smul.addr %s740, 4
        %s742 = scalar_lea.vmem %s13, %s741
        %p743 = scmp.lt.s32.totalorder %s34, 1
        %s744 = scalar_select %p743, %s34, 1
        %s745 = scalar_lea.vmem %s14, %s744
        %p747 = scmp.eq.s32.totalorder %s34, 0
        // Predicated region
        $region81: #{tpu_custom_call.1} parent=79 // pred_check
          %p748 = pneg %p747
        $region82: #{tpu_custom_call.1} parent=79 // pred_check_branch
          %750 = sbr.rel (%p748) target = $region84
        $region83: #{tpu_custom_call.1} parent=79 // pred_region
          %v751 = vld [vmem:[%s687] sm:$0xff]
          %v752 = vld [vmem:[%s1] sm:$0xff]
          %v753 = vadd.f32 %v751, %v752
          %vm754 = vcmask 261120
          %755 = vst.msk [vmem:[%s683] sm:$0xff] %vm754, %v753
          %v756 = vlaneseq
          %v757 = vshrl.u32 %v756, 7
          %v758 = vlaneseq
          %v759 = vand.u32 %v758, 127
          %vm760 = vcmp.le.s32.totalorder %v759, %v757
          %v761 = vsel %vm760, 0.0, -1e+30
          %vm762 = vcmask 64512
          %763 = vst.msk [vmem:[#allocation2] sm:$0xff] %vm762, %v761
        $region84: #{tpu_custom_call.1} parent=79 // pred_fallthru
          _
        %p764 = scmp.ge.s32.totalorder %s34, 1
        %p765 = scmp.le.s32.totalorder %s34, 1
        %p766 = pnand %p764, %p765
        %p767 = pneg %p766
        // Predicated region
        $region85: #{tpu_custom_call.1} parent=79 // pred_check
          _
        $region86: #{tpu_custom_call.1} parent=79 // pred_check_branch
          %769 = sbr.rel (%p766) target = $region88
        $region87: #{tpu_custom_call.1} parent=79 // pred_region
          %v770 = vld [vmem:[%s696] sm:$0x3]
          %vm771 = vcmask 254976
          %772 = vst.msk [vmem:[%s683 + $0x1] sm:$0x3] %vm771, %v770
        $region88: #{tpu_custom_call.1} parent=79 // pred_fallthru
          _
        %v773 = vld [vmem:[%s683] sm:$0xff]
        %v774 = vld [vmem:[%s704] sm:$0x1]
        %v775 = vld [vmem:[%s707] sm:$0x1]
        %vm776 = vcmask 261120
        %v777 = vsel %vm776, %v773, 0.0
        %778 = vadd.xlane.f32.xlu0 %v777
        %v779 = vpop.xlane.xlu0 %778
        %v780 = vrcp.pop 32.0
        %v781 = vmul.f32 %v779, %v780
        %v782 = vsub.f32 %v773, %v781
        %v783 = vmul.f32 %v782, %v782
        %v784 = vsel %vm776, %v783, 0.0
        %785 = vadd.xlane.f32.xlu0 %v784
        %v786 = vpop.xlane.xlu0 %785
        %v787 = vmul.f32 %v786, %v780
        %v788 = vadd.f32 %v787, 1e-05
        %v789 = vrsqrt.pop %v788
        %v790 = vmul.f32 %v782, %v789
        %v792 = vlaneseq
        %v793 = vshrl.u32 %v792, 7
        %v794 = vsub.s32 0, %v793
        %v795 = vrot.slane %v774, %v794
        %v797 = vmul.f32 %v790, %v795
        %v799 = vlaneseq
        %v800 = vshrl.u32 %v799, 7
        %v801 = vsub.s32 0, %v800
        %v802 = vrot.slane %v775, %v801
        %v804 = vadd.f32 %v797, %v802
        %v805 = vpack.c.bf16 %v804, %v804
        %v806 = vld [vmem:[%s712] sm:$0xf]
        %v807 = vld [vmem:[%s712 + $0x4] sm:$0xf]
        %v808 = vld [vmem:[%s712 + $0x8] sm:$0xf]
        %v809 = vld [vmem:[%s712 + $0xc] sm:$0xf]
        %v810 = vld [vmem:[%s715] sm:$0x1]
        %v812 = vlaneseq
        %v813 = vshrl.u32 %v812, 7
        %v814 = vsub.s32 0, %v813
        %v815 = vrot.slane %v810, %v814
        %v821 = vunpack.c.l.b16 %v806
        %v822 = vunpack.c.l.b16 %v807
        %v823 = vunpack.c.l.b16 %v808
        %v824 = vunpack.c.l.b16 %v809
        %v825 = vpack.c.b16 %v822, %v821
        %v826 = vpack.c.b16 %v824, %v823
        %v830 = vsel %vm776, %v805, 0
        %832 = vmatprep.subr.bf16.mxu0 0
        %833 = vmatpush1.bf16.msra.mxu0 %v825
        %834 = vmatprep.subr.bf16.mxu0 0
        %835 = vmatpush1.bf16.msra.mxu0 %v826
        %836 = vmatprep.subr.bf16.mxu0 0
        %837 = vmatpush1.bf16.msra.mxu0 0
        %838 = vmatprep.subr.bf16.mxu0 0
        %839 = vmatpush1.bf16.msra.mxu0 0
        %840 = vmatprep.subr.bf16.mxu0 0
        %841 = vmatpush1.bf16.msra.mxu0 0
        %842 = vmatprep.subr.bf16.mxu0 0
        %843 = vmatpush1.bf16.msra.mxu0 0
        %844 = vmatprep.subr.bf16.mxu0 0
        %845 = vmatpush1.bf16.msra.mxu0 0
        %846 = vmatprep.subr.bf16.mxu0 0
        %847 = vmatpush1.bf16.msra.mxu0 0
        %848 = vmatprep.subr.bf16.mxu0 0
        %849 = vmatpush1.bf16.msra.mxu0 0
        %850 = vmatprep.subr.bf16.mxu0 0
        %851 = vmatpush1.bf16.msra.mxu0 0
        %852 = vmatprep.subr.bf16.mxu0 0
        %853 = vmatpush1.bf16.msra.mxu0 0
        %854 = vmatprep.subr.bf16.mxu0 0
        %855 = vmatpush1.bf16.msra.mxu0 0
        %856 = vmatprep.subr.bf16.mxu0 0
        %857 = vmatpush1.bf16.msra.mxu0 0
        %858 = vmatprep.subr.bf16.mxu0 0
        %859 = vmatpush1.bf16.msra.mxu0 0
        %860 = vmatprep.subr.bf16.mxu0 0
        %861 = vmatpush1.bf16.msra.mxu0 0
        %862 = vmatprep.subr.bf16.mxu0 0
        %863 = vmatpush1.bf16.msra.mxu0 0
        %864 = vmatprep.mubr.bf16.mxu0 0
        %865 = vmatmul.mubr.bf16.gmra.mrb[0].mxu0 %v830
        %v866 = vpop.f32.mrb[0].mxu0
        %v867 = vadd.f32 %v815, %v866
        %v868 = vpop.f32.mrb[0].mxu0
        %v869 = vpop.f32.mrb[0].mxu0
        %v870 = vpop.f32.mrb[0].mxu0
        %871 = vdwg.mxu0
        %v872 = vmul.f32 %v867, 0.35355338
        %874 = vrot.lane.b32.xlu0 %v872, 120
        %v875 = vpop.permute.xlu0 %874
        %877 = vrot.lane.b32.xlu0 %v872, 112
        %v878 = vpop.permute.xlu0 %877
        %880 = vrot.lane.b32.xlu0 %v872, 104
        %v881 = vpop.permute.xlu0 %880
        %v883 = vpack.c.bf16 %v872, %v872
        %v884 = vpack.c.bf16 %v875, %v875
        %v885 = vpack.c.bf16 %v878, %v878
        %v886 = vpack.c.bf16 %v881, %v881
        %888 = vrot.lane.b32.xlu0 %v867, 120
        %v889 = vpop.permute.xlu0 %888
        %891 = vrot.lane.b32.xlu0 %v867, 112
        %v892 = vpop.permute.xlu0 %891
        %894 = vrot.lane.b32.xlu0 %v867, 104
        %v895 = vpop.permute.xlu0 %894
        %v897 = vpack.c.bf16 %v867, %v867
        %v898 = vpack.c.bf16 %v889, %v889
        %v899 = vpack.c.bf16 %v892, %v892
        %v900 = vpack.c.bf16 %v895, %v895
        %v901 = vld [vmem:[#allocation2] sm:$0xff]
        %903 = vrot.lane.b32.xlu0 %v897, 96
        %v904 = vpop.permute.xlu0 %903
        %vm905 = vcmask 64512
        %v907 = vsel %vm905, %v883, 0
        %v910 = vsel %vm905, %v904, 0
        %912 = vmatprep.subr.bf16.mxu0 0
        %913 = vmatpush1.bf16.xpose.msra.mxu0 %v910
        %914 = vmatprep.subr.bf16.mxu0 0
        %915 = vmatpush1.bf16.xpose.msra.mxu0 0
        %916 = vmatprep.subr.bf16.mxu0 0
        %917 = vmatpush1.bf16.xpose.msra.mxu0 0
        %918 = vmatprep.subr.bf16.mxu0 0
        %919 = vmatpush1.bf16.xpose.msra.mxu0 0
        %920 = vmatprep.subr.bf16.mxu0 0
        %921 = vmatpush1.bf16.xpose.msra.mxu0 0
        %922 = vmatprep.subr.bf16.mxu0 0
        %923 = vmatpush1.bf16.xpose.msra.mxu0 0
        %924 = vmatprep.subr.bf16.mxu0 0
        %925 = vmatpush1.bf16.xpose.msra.mxu0 0
        %926 = vmatprep.subr.bf16.mxu0 0
        %927 = vmatpush1.bf16.xpose.msra.mxu0 0
        %928 = vmatprep.subr.bf16.mxu0 0
        %929 = vmatpush1.bf16.xpose.msra.mxu0 0
        %930 = vmatprep.subr.bf16.mxu0 0
        %931 = vmatpush1.bf16.xpose.msra.mxu0 0
        %932 = vmatprep.subr.bf16.mxu0 0
        %933 = vmatpush1.bf16.xpose.msra.mxu0 0
        %934 = vmatprep.subr.bf16.mxu0 0
        %935 = vmatpush1.bf16.xpose.msra.mxu0 0
        %936 = vmatprep.subr.bf16.mxu0 0
        %937 = vmatpush1.bf16.xpose.msra.mxu0 0
        %938 = vmatprep.subr.bf16.mxu0 0
        %939 = vmatpush1.bf16.xpose.msra.mxu0 0
        %940 = vmatprep.subr.bf16.mxu0 0
        %941 = vmatpush1.bf16.xpose.msra.mxu0 0
        %942 = vmatprep.subr.bf16.mxu0 0
        %943 = vmatpush1.bf16.xpose.msra.mxu0 0
        %944 = vmatprep.mubr.bf16.mxu0 0
        %945 = vmatmul.mubr.bf16.gmra.mrb[0].mxu0 %v907
        %v946 = vpop.f32.mrb[0].mxu0
        %v947 = vadd.f32 %v901, %v946
        %v948 = vpop.f32.mrb[0].mxu0
        %v949 = vpop.f32.mrb[0].mxu0
        %v950 = vpop.f32.mrb[0].mxu0
        %951 = vdwg.mxu0
        %953 = vrot.lane.b32.xlu0 %v898, 96
        %v954 = vpop.permute.xlu0 %953
        %v956 = vsel %vm905, %v884, 0
        %v959 = vsel %vm905, %v954, 0
        %961 = vmatprep.subr.bf16.mxu0 0
        %962 = vmatpush1.bf16.xpose.msra.mxu0 %v959
        %963 = vmatprep.subr.bf16.mxu0 0
        %964 = vmatpush1.bf16.xpose.msra.mxu0 0
        %965 = vmatprep.subr.bf16.mxu0 0
        %966 = vmatpush1.bf16.xpose.msra.mxu0 0
        %967 = vmatprep.subr.bf16.mxu0 0
        %968 = vmatpush1.bf16.xpose.msra.mxu0 0
        %969 = vmatprep.subr.bf16.mxu0 0
        %970 = vmatpush1.bf16.xpose.msra.mxu0 0
        %971 = vmatprep.subr.bf16.mxu0 0
        %972 = vmatpush1.bf16.xpose.msra.mxu0 0
        %973 = vmatprep.subr.bf16.mxu0 0
        %974 = vmatpush1.bf16.xpose.msra.mxu0 0
        %975 = vmatprep.subr.bf16.mxu0 0
        %976 = vmatpush1.bf16.xpose.msra.mxu0 0
        %977 = vmatprep.subr.bf16.mxu0 0
        %978 = vmatpush1.bf16.xpose.msra.mxu0 0
        %979 = vmatprep.subr.bf16.mxu0 0
        %980 = vmatpush1.bf16.xpose.msra.mxu0 0
        %981 = vmatprep.subr.bf16.mxu0 0
        %982 = vmatpush1.bf16.xpose.msra.mxu0 0
        %983 = vmatprep.subr.bf16.mxu0 0
        %984 = vmatpush1.bf16.xpose.msra.mxu0 0
        %985 = vmatprep.subr.bf16.mxu0 0
        %986 = vmatpush1.bf16.xpose.msra.mxu0 0
        %987 = vmatprep.subr.bf16.mxu0 0
        %988 = vmatpush1.bf16.xpose.msra.mxu0 0
        %989 = vmatprep.subr.bf16.mxu0 0
        %990 = vmatpush1.bf16.xpose.msra.mxu0 0
        %991 = vmatprep.subr.bf16.mxu0 0
        %992 = vmatpush1.bf16.xpose.msra.mxu0 0
        %993 = vmatprep.mubr.bf16.mxu0 0
        %994 = vmatmul.mubr.bf16.gmra.mrb[0].mxu0 %v956
        %v995 = vpop.f32.mrb[0].mxu0
        %v996 = vadd.f32 %v901, %v995
        %v997 = vpop.f32.mrb[0].mxu0
        %v998 = vpop.f32.mrb[0].mxu0
        %v999 = vpop.f32.mrb[0].mxu0
        %1000 = vdwg.mxu0
        %1002 = vrot.lane.b32.xlu0 %v899, 96
        %v1003 = vpop.permute.xlu0 %1002
        %v1005 = vsel %vm905, %v885, 0
        %v1008 = vsel %vm905, %v1003, 0
        %1010 = vmatprep.subr.bf16.mxu0 0
        %1011 = vmatpush1.bf16.xpose.msra.mxu0 %v1008
        %1012 = vmatprep.subr.bf16.mxu0 0
        %1013 = vmatpush1.bf16.xpose.msra.mxu0 0
        %1014 = vmatprep.subr.bf16.mxu0 0
        %1015 = vmatpush1.bf16.xpose.msra.mxu0 0
        %1016 = vmatprep.subr.bf16.mxu0 0
        %1017 = vmatpush1.bf16.xpose.msra.mxu0 0
        %1018 = vmatprep.subr.bf16.mxu0 0
        %1019 = vmatpush1.bf16.xpose.msra.mxu0 0
        %1020 = vmatprep.subr.bf16.mxu0 0
        %1021 = vmatpush1.bf16.xpose.msra.mxu0 0
        %1022 = vmatprep.subr.bf16.mxu0 0
        %1023 = vmatpush1.bf16.xpose.msra.mxu0 0
        %1024 = vmatprep.subr.bf16.mxu0 0
        %1025 = vmatpush1.bf16.xpose.msra.mxu0 0
        %1026 = vmatprep.subr.bf16.mxu0 0
        %1027 = vmatpush1.bf16.xpose.msra.mxu0 0
        %1028 = vmatprep.subr.bf16.mxu0 0
        %1029 = vmatpush1.bf16.xpose.msra.mxu0 0
        %1030 = vmatprep.subr.bf16.mxu0 0
        %1031 = vmatpush1.bf16.xpose.msra.mxu0 0
        %1032 = vmatprep.subr.bf16.mxu0 0
        %1033 = vmatpush1.bf16.xpose.msra.mxu0 0
        %1034 = vmatprep.subr.bf16.mxu0 0
        %1035 = vmatpush1.bf16.xpose.msra.mxu0 0
        %1036 = vmatprep.subr.bf16.mxu0 0
        %1037 = vmatpush1.bf16.xpose.msra.mxu0 0
        %1038 = vmatprep.subr.bf16.mxu0 0
        %1039 = vmatpush1.bf16.xpose.msra.mxu0 0
        %1040 = vmatprep.subr.bf16.mxu0 0
        %1041 = vmatpush1.bf16.xpose.msra.mxu0 0
        %1042 = vmatprep.mubr.bf16.mxu0 0
        %1043 = vmatmul.mubr.bf16.gmra.mrb[0].mxu0 %v1005
        %v1044 = vpop.f32.mrb[0].mxu0
        %v1045 = vadd.f32 %v901, %v1044
        %v1046 = vpop.f32.mrb[0].mxu0
        %v1047 = vpop.f32.mrb[0].mxu0
        %v1048 = vpop.f32.mrb[0].mxu0
        %1049 = vdwg.mxu0
        %1051 = vrot.lane.b32.xlu0 %v900, 96
        %v1052 = vpop.permute.xlu0 %1051
        %v1054 = vsel %vm905, %v886, 0
        %v1057 = vsel %vm905, %v1052, 0
        %1059 = vmatprep.subr.bf16.mxu0 0
        %1060 = vmatpush1.bf16.xpose.msra.mxu0 %v1057
        %1061 = vmatprep.subr.bf16.mxu0 0
        %1062 = vmatpush1.bf16.xpose.msra.mxu0 0
        %1063 = vmatprep.subr.bf16.mxu0 0
        %1064 = vmatpush1.bf16.xpose.msra.mxu0 0
        %1065 = vmatprep.subr.bf16.mxu0 0
        %1066 = vmatpush1.bf16.xpose.msra.mxu0 0
        %1067 = vmatprep.subr.bf16.mxu0 0
        %1068 = vmatpush1.bf16.xpose.msra.mxu0 0
        %1069 = vmatprep.subr.bf16.mxu0 0
        %1070 = vmatpush1.bf16.xpose.msra.mxu0 0
        %1071 = vmatprep.subr.bf16.mxu0 0
        %1072 = vmatpush1.bf16.xpose.msra.mxu0 0
        %1073 = vmatprep.subr.bf16.mxu0 0
        %1074 = vmatpush1.bf16.xpose.msra.mxu0 0
        %1075 = vmatprep.subr.bf16.mxu0 0
        %1076 = vmatpush1.bf16.xpose.msra.mxu0 0
        %1077 = vmatprep.subr.bf16.mxu0 0
        %1078 = vmatpush1.bf16.xpose.msra.mxu0 0
        %1079 = vmatprep.subr.bf16.mxu0 0
        %1080 = vmatpush1.bf16.xpose.msra.mxu0 0
        %1081 = vmatprep.subr.bf16.mxu0 0
        %1082 = vmatpush1.bf16.xpose.msra.mxu0 0
        %1083 = vmatprep.subr.bf16.mxu0 0
        %1084 = vmatpush1.bf16.xpose.msra.mxu0 0
        %1085 = vmatprep.subr.bf16.mxu0 0
        %1086 = vmatpush1.bf16.xpose.msra.mxu0 0
        %1087 = vmatprep.subr.bf16.mxu0 0
        %1088 = vmatpush1.bf16.xpose.msra.mxu0 0
        %1089 = vmatprep.subr.bf16.mxu0 0
        %1090 = vmatpush1.bf16.xpose.msra.mxu0 0
        %1091 = vmatprep.mubr.bf16.mxu0 0
        %1092 = vmatmul.mubr.bf16.gmra.mrb[0].mxu0 %v1054
        %v1093 = vpop.f32.mrb[0].mxu0
        %v1094 = vadd.f32 %v901, %v1093
        %v1095 = vpop.f32.mrb[0].mxu0
        %v1096 = vpop.f32.mrb[0].mxu0
        %v1097 = vpop.f32.mrb[0].mxu0
        %1098 = vdwg.mxu0
        %v1099 = vsel %vm905, %v947, -inf
        %1100 = vmax.xlane.f32.xlu0 %v1099
        %v1101 = vpop.xlane.xlu0 %1100
        %v1102 = vsel %vm905, %v996, -inf
        %1103 = vmax.xlane.f32.xlu0 %v1102
        %v1104 = vpop.xlane.xlu0 %1103
        %v1105 = vsel %vm905, %v1045, -inf
        %1106 = vmax.xlane.f32.xlu0 %v1105
        %v1107 = vpop.xlane.xlu0 %1106
        %v1108 = vsel %vm905, %v1094, -inf
        %1109 = vmax.xlane.f32.xlu0 %v1108
        %v1110 = vpop.xlane.xlu0 %1109
        %v1111 = vsub.f32 %v947, %v1101
        %v1112 = vsub.f32 %v996, %v1104
        %v1113 = vsub.f32 %v1045, %v1107
        %v1114 = vsub.f32 %v1094, %v1110
        %v1115 = vmul.f32 %v1111, 1.442695
        %v1116 = vpow.pop %v1115
        %v1117 = vmul.f32 %v1112, 1.442695
        %v1118 = vpow.pop %v1117
        %v1119 = vmul.f32 %v1113, 1.442695
        %v1120 = vpow.pop %v1119
        %v1121 = vmul.f32 %v1114, 1.442695
        %v1122 = vpow.pop %v1121
        %v1123 = vsel %vm905, %v1116, 0.0
        %1124 = vadd.xlane.f32.xlu0 %v1123
        %v1125 = vpop.xlane.xlu0 %1124
        %v1126 = vsel %vm905, %v1118, 0.0
        %1127 = vadd.xlane.f32.xlu0 %v1126
        %v1128 = vpop.xlane.xlu0 %1127
        %v1129 = vsel %vm905, %v1120, 0.0
        %1130 = vadd.xlane.f32.xlu0 %v1129
        %v1131 = vpop.xlane.xlu0 %1130
        %v1132 = vsel %vm905, %v1122, 0.0
        %1133 = vadd.xlane.f32.xlu0 %v1132
        %v1134 = vpop.xlane.xlu0 %1133
        %v1135 = vrcp.pop %v1125
        %v1136 = vrcp.pop %v1128
        %v1137 = vrcp.pop %v1131
        %v1138 = vrcp.pop %v1134
        %v1139 = vmul.f32 %v1116, %v1135
        %v1140 = vmul.f32 %v1118, %v1136
        %v1141 = vmul.f32 %v1120, %v1137
        %v1142 = vmul.f32 %v1122, %v1138
        %v1143 = vpack.c.bf16 %v1139, %v1139
        %v1144 = vpack.c.bf16 %v1140, %v1140
        %v1145 = vpack.c.bf16 %v1141, %v1141
        %v1146 = vpack.c.bf16 %v1142, %v1142
        %1147 = vrot.lane.b32.xlu0 %v897, 64
        %v1148 = vpop.permute.xlu0 %1147
        %v1150 = vsel %vm905, %v1143, 0
        %vm1152 = vcmask 1043456
        %v1154 = vsel %vm1152, %v1148, 0
        %1156 = vmatprep.subr.bf16.mxu0 0
        %1157 = vmatpush1.bf16.msra.mxu0 %v1154
        %1158 = vmatprep.subr.bf16.mxu0 0
        %1159 = vmatpush1.bf16.msra.mxu0 0
        %1160 = vmatprep.subr.bf16.mxu0 0
        %1161 = vmatpush1.bf16.msra.mxu0 0
        %1162 = vmatprep.subr.bf16.mxu0 0
        %1163 = vmatpush1.bf16.msra.mxu0 0
        %1164 = vmatprep.subr.bf16.mxu0 0
        %1165 = vmatpush1.bf16.msra.mxu0 0
        %1166 = vmatprep.subr.bf16.mxu0 0
        %1167 = vmatpush1.bf16.msra.mxu0 0
        %1168 = vmatprep.subr.bf16.mxu0 0
        %1169 = vmatpush1.bf16.msra.mxu0 0
        %1170 = vmatprep.subr.bf16.mxu0 0
        %1171 = vmatpush1.bf16.msra.mxu0 0
        %1172 = vmatprep.subr.bf16.mxu0 0
        %1173 = vmatpush1.bf16.msra.mxu0 0
        %1174 = vmatprep.subr.bf16.mxu0 0
        %1175 = vmatpush1.bf16.msra.mxu0 0
        %1176 = vmatprep.subr.bf16.mxu0 0
        %1177 = vmatpush1.bf16.msra.mxu0 0
        %1178 = vmatprep.subr.bf16.mxu0 0
        %1179 = vmatpush1.bf16.msra.mxu0 0
        %1180 = vmatprep.subr.bf16.mxu0 0
        %1181 = vmatpush1.bf16.msra.mxu0 0
        %1182 = vmatprep.subr.bf16.mxu0 0
        %1183 = vmatpush1.bf16.msra.mxu0 0
        %1184 = vmatprep.subr.bf16.mxu0 0
        %1185 = vmatpush1.bf16.msra.mxu0 0
        %1186 = vmatprep.subr.bf16.mxu0 0
        %1187 = vmatpush1.bf16.msra.mxu0 0
        %1188 = vmatprep.mubr.bf16.mxu0 0
        %1189 = vmatmul.mubr.bf16.gmra.mrb[0].mxu0 %v1150
        %v1190 = vpop.f32.mrb[0].mxu0
        %v1191 = vadd.f32 0.0, %v1190
        %v1192 = vpop.f32.mrb[0].mxu0
        %v1193 = vpop.f32.mrb[0].mxu0
        %v1194 = vpop.f32.mrb[0].mxu0
        %1195 = vdwg.mxu0
        %1196 = vrot.lane.b32.xlu0 %v898, 64
        %v1197 = vpop.permute.xlu0 %1196
        %v1199 = vsel %vm905, %v1144, 0
        %v1202 = vsel %vm1152, %v1197, 0
        %1204 = vmatprep.subr.bf16.mxu0 0
        %1205 = vmatpush1.bf16.msra.mxu0 %v1202
        %1206 = vmatprep.subr.bf16.mxu0 0
        %1207 = vmatpush1.bf16.msra.mxu0 0
        %1208 = vmatprep.subr.bf16.mxu0 0
        %1209 = vmatpush1.bf16.msra.mxu0 0
        %1210 = vmatprep.subr.bf16.mxu0 0
        %1211 = vmatpush1.bf16.msra.mxu0 0
        %1212 = vmatprep.subr.bf16.mxu0 0
        %1213 = vmatpush1.bf16.msra.mxu0 0
        %1214 = vmatprep.subr.bf16.mxu0 0
        %1215 = vmatpush1.bf16.msra.mxu0 0
        %1216 = vmatprep.subr.bf16.mxu0 0
        %1217 = vmatpush1.bf16.msra.mxu0 0
        %1218 = vmatprep.subr.bf16.mxu0 0
        %1219 = vmatpush1.bf16.msra.mxu0 0
        %1220 = vmatprep.subr.bf16.mxu0 0
        %1221 = vmatpush1.bf16.msra.mxu0 0
        %1222 = vmatprep.subr.bf16.mxu0 0
        %1223 = vmatpush1.bf16.msra.mxu0 0
        %1224 = vmatprep.subr.bf16.mxu0 0
        %1225 = vmatpush1.bf16.msra.mxu0 0
        %1226 = vmatprep.subr.bf16.mxu0 0
        %1227 = vmatpush1.bf16.msra.mxu0 0
        %1228 = vmatprep.subr.bf16.mxu0 0
        %1229 = vmatpush1.bf16.msra.mxu0 0
        %1230 = vmatprep.subr.bf16.mxu0 0
        %1231 = vmatpush1.bf16.msra.mxu0 0
        %1232 = vmatprep.subr.bf16.mxu0 0
        %1233 = vmatpush1.bf16.msra.mxu0 0
        %1234 = vmatprep.subr.bf16.mxu0 0
        %1235 = vmatpush1.bf16.msra.mxu0 0
        %1236 = vmatprep.mubr.bf16.mxu0 0
        %1237 = vmatmul.mubr.bf16.gmra.mrb[0].mxu0 %v1199
        %v1238 = vpop.f32.mrb[0].mxu0
        %v1239 = vadd.f32 0.0, %v1238
        %v1240 = vpop.f32.mrb[0].mxu0
        %v1241 = vpop.f32.mrb[0].mxu0
        %v1242 = vpop.f32.mrb[0].mxu0
        %1243 = vdwg.mxu0
        %1244 = vrot.lane.b32.xlu0 %v899, 64
        %v1245 = vpop.permute.xlu0 %1244
        %v1247 = vsel %vm905, %v1145, 0
        %v1250 = vsel %vm1152, %v1245, 0
        %1252 = vmatprep.subr.bf16.mxu0 0
        %1253 = vmatpush1.bf16.msra.mxu0 %v1250
        %1254 = vmatprep.subr.bf16.mxu0 0
        %1255 = vmatpush1.bf16.msra.mxu0 0
        %1256 = vmatprep.subr.bf16.mxu0 0
        %1257 = vmatpush1.bf16.msra.mxu0 0
        %1258 = vmatprep.subr.bf16.mxu0 0
        %1259 = vmatpush1.bf16.msra.mxu0 0
        %1260 = vmatprep.subr.bf16.mxu0 0
        %1261 = vmatpush1.bf16.msra.mxu0 0
        %1262 = vmatprep.subr.bf16.mxu0 0
        %1263 = vmatpush1.bf16.msra.mxu0 0
        %1264 = vmatprep.subr.bf16.mxu0 0
        %1265 = vmatpush1.bf16.msra.mxu0 0
        %1266 = vmatprep.subr.bf16.mxu0 0
        %1267 = vmatpush1.bf16.msra.mxu0 0
        %1268 = vmatprep.subr.bf16.mxu0 0
        %1269 = vmatpush1.bf16.msra.mxu0 0
        %1270 = vmatprep.subr.bf16.mxu0 0
        %1271 = vmatpush1.bf16.msra.mxu0 0
        %1272 = vmatprep.subr.bf16.mxu0 0
        %1273 = vmatpush1.bf16.msra.mxu0 0
        %1274 = vmatprep.subr.bf16.mxu0 0
        %1275 = vmatpush1.bf16.msra.mxu0 0
        %1276 = vmatprep.subr.bf16.mxu0 0
        %1277 = vmatpush1.bf16.msra.mxu0 0
        %1278 = vmatprep.subr.bf16.mxu0 0
        %1279 = vmatpush1.bf16.msra.mxu0 0
        %1280 = vmatprep.subr.bf16.mxu0 0
        %1281 = vmatpush1.bf16.msra.mxu0 0
        %1282 = vmatprep.subr.bf16.mxu0 0
        %1283 = vmatpush1.bf16.msra.mxu0 0
        %1284 = vmatprep.mubr.bf16.mxu0 0
        %1285 = vmatmul.mubr.bf16.gmra.mrb[0].mxu0 %v1247
        %v1286 = vpop.f32.mrb[0].mxu0
        %v1287 = vadd.f32 0.0, %v1286
        %v1288 = vpop.f32.mrb[0].mxu0
        %v1289 = vpop.f32.mrb[0].mxu0
        %v1290 = vpop.f32.mrb[0].mxu0
        %1291 = vdwg.mxu0
        %1292 = vrot.lane.b32.xlu0 %v900, 64
        %v1293 = vpop.permute.xlu0 %1292
        %v1295 = vsel %vm905, %v1146, 0
        %v1298 = vsel %vm1152, %v1293, 0
        %1300 = vmatprep.subr.bf16.mxu0 0
        %1301 = vmatpush1.bf16.msra.mxu0 %v1298
        %1302 = vmatprep.subr.bf16.mxu0 0
        %1303 = vmatpush1.bf16.msra.mxu0 0
        %1304 = vmatprep.subr.bf16.mxu0 0
        %1305 = vmatpush1.bf16.msra.mxu0 0
        %1306 = vmatprep.subr.bf16.mxu0 0
        %1307 = vmatpush1.bf16.msra.mxu0 0
        %1308 = vmatprep.subr.bf16.mxu0 0
        %1309 = vmatpush1.bf16.msra.mxu0 0
        %1310 = vmatprep.subr.bf16.mxu0 0
        %1311 = vmatpush1.bf16.msra.mxu0 0
        %1312 = vmatprep.subr.bf16.mxu0 0
        %1313 = vmatpush1.bf16.msra.mxu0 0
        %1314 = vmatprep.subr.bf16.mxu0 0
        %1315 = vmatpush1.bf16.msra.mxu0 0
        %1316 = vmatprep.subr.bf16.mxu0 0
        %1317 = vmatpush1.bf16.msra.mxu0 0
        %1318 = vmatprep.subr.bf16.mxu0 0
        %1319 = vmatpush1.bf16.msra.mxu0 0
        %1320 = vmatprep.subr.bf16.mxu0 0
        %1321 = vmatpush1.bf16.msra.mxu0 0
        %1322 = vmatprep.subr.bf16.mxu0 0
        %1323 = vmatpush1.bf16.msra.mxu0 0
        %1324 = vmatprep.subr.bf16.mxu0 0
        %1325 = vmatpush1.bf16.msra.mxu0 0
        %1326 = vmatprep.subr.bf16.mxu0 0
        %1327 = vmatpush1.bf16.msra.mxu0 0
        %1328 = vmatprep.subr.bf16.mxu0 0
        %1329 = vmatpush1.bf16.msra.mxu0 0
        %1330 = vmatprep.subr.bf16.mxu0 0
        %1331 = vmatpush1.bf16.msra.mxu0 0
        %1332 = vmatprep.mubr.bf16.mxu0 0
        %1333 = vmatmul.mubr.bf16.gmra.mrb[0].mxu0 %v1295
        %v1334 = vpop.f32.mrb[0].mxu0
        %v1335 = vadd.f32 0.0, %v1334
        %v1336 = vpop.f32.mrb[0].mxu0
        %v1337 = vpop.f32.mrb[0].mxu0
        %v1338 = vpop.f32.mrb[0].mxu0
        %1339 = vdwg.mxu0
        %1341 = vrot.lane.b32.xlu0 %v1239, 8
        %v1342 = vpop.permute.xlu0 %1341
        %1345 = vrot.lane.b32.xlu0 %v1287, 16
        %v1346 = vpop.permute.xlu0 %1345
        %1349 = vrot.lane.b32.xlu0 %v1335, 24
        %v1350 = vpop.permute.xlu0 %1349
        %v1352 = vsel %vm905, %v1191, %v1342
        %vm1353 = vcmask 130048
        %v1354 = vsel %vm1353, %v1352, %v1346
        %vm1355 = vcmask 195584
        %v1356 = vsel %vm1355, %v1354, %v1350
        %v1357 = vpack.c.bf16 %v1356, %v1356
        %v1358 = vld [vmem:[%s720] sm:$0xf]
        %v1359 = vld [vmem:[%s720 + $0x4] sm:$0xf]
        %v1360 = vld [vmem:[%s720 + $0x8] sm:$0xf]
        %v1361 = vld [vmem:[%s720 + $0xc] sm:$0xf]
        %v1362 = vld [vmem:[%s723] sm:$0x1]
        %v1364 = vlaneseq
        %v1365 = vshrl.u32 %v1364, 7
        %v1366 = vsub.s32 0, %v1365
        %v1367 = vrot.slane %v1362, %v1366
        %v1373 = vunpack.c.l.b16 %v1358
        %v1374 = vunpack.c.l.b16 %v1359
        %v1375 = vunpack.c.l.b16 %v1360
        %v1376 = vunpack.c.l.b16 %v1361
        %v1377 = vpack.c.b16 %v1374, %v1373
        %v1378 = vpack.c.b16 %v1376, %v1375
        %v1382 = vsel %vm776, %v1357, 0
        %1384 = vmatprep.subr.bf16.mxu0 0
        %1385 = vmatpush1.bf16.msra.mxu0 %v1377
        %1386 = vmatprep.subr.bf16.mxu0 0
        %1387 = vmatpush1.bf16.msra.mxu0 %v1378
        %1388 = vmatprep.subr.bf16.mxu0 0
        %1389 = vmatpush1.bf16.msra.mxu0 0
        %1390 = vmatprep.subr.bf16.mxu0 0
        %1391 = vmatpush1.bf16.msra.mxu0 0
        %1392 = vmatprep.subr.bf16.mxu0 0
        %1393 = vmatpush1.bf16.msra.mxu0 0
        %1394 = vmatprep.subr.bf16.mxu0 0
        %1395 = vmatpush1.bf16.msra.mxu0 0
        %1396 = vmatprep.subr.bf16.mxu0 0
        %1397 = vmatpush1.bf16.msra.mxu0 0
        %1398 = vmatprep.subr.bf16.mxu0 0
        %1399 = vmatpush1.bf16.msra.mxu0 0
        %1400 = vmatprep.subr.bf16.mxu0 0
        %1401 = vmatpush1.bf16.msra.mxu0 0
        %1402 = vmatprep.subr.bf16.mxu0 0
        %1403 = vmatpush1.bf16.msra.mxu0 0
        %1404 = vmatprep.subr.bf16.mxu0 0
        %1405 = vmatpush1.bf16.msra.mxu0 0
        %1406 = vmatprep.subr.bf16.mxu0 0
        %1407 = vmatpush1.bf16.msra.mxu0 0
        %1408 = vmatprep.subr.bf16.mxu0 0
        %1409 = vmatpush1.bf16.msra.mxu0 0
        %1410 = vmatprep.subr.bf16.mxu0 0
        %1411 = vmatpush1.bf16.msra.mxu0 0
        %1412 = vmatprep.subr.bf16.mxu0 0
        %1413 = vmatpush1.bf16.msra.mxu0 0
        %1414 = vmatprep.subr.bf16.mxu0 0
        %1415 = vmatpush1.bf16.msra.mxu0 0
        %1416 = vmatprep.mubr.bf16.mxu0 0
        %1417 = vmatmul.mubr.bf16.gmra.mrb[0].mxu0 %v1382
        %v1418 = vpop.f32.mrb[0].mxu0
        %v1419 = vadd.f32 %v1367, %v1418
        %v1420 = vpop.f32.mrb[0].mxu0
        %v1421 = vpop.f32.mrb[0].mxu0
        %v1422 = vpop.f32.mrb[0].mxu0
        %1423 = vdwg.mxu0
        %v1424 = vadd.f32 %v773, %v1419
        %v1425 = vld [vmem:[%s726] sm:$0x1]
        %v1426 = vld [vmem:[%s729] sm:$0x1]
        %v1427 = vsel %vm776, %v1424, 0.0
        %1428 = vadd.xlane.f32.xlu0 %v1427
        %v1429 = vpop.xlane.xlu0 %1428
        %v1430 = vmul.f32 %v1429, %v780
        %v1431 = vsub.f32 %v1424, %v1430
        %v1432 = vmul.f32 %v1431, %v1431
        %v1433 = vsel %vm776, %v1432, 0.0
        %1434 = vadd.xlane.f32.xlu0 %v1433
        %v1435 = vpop.xlane.xlu0 %1434
        %v1436 = vmul.f32 %v1435, %v780
        %v1437 = vadd.f32 %v1436, 1e-05
        %v1438 = vrsqrt.pop %v1437
        %v1439 = vmul.f32 %v1431, %v1438
        %v1441 = vlaneseq
        %v1442 = vshrl.u32 %v1441, 7
        %v1443 = vsub.s32 0, %v1442
        %v1444 = vrot.slane %v1425, %v1443
        %v1446 = vmul.f32 %v1439, %v1444
        %v1448 = vlaneseq
        %v1449 = vshrl.u32 %v1448, 7
        %v1450 = vsub.s32 0, %v1449
        %v1451 = vrot.slane %v1426, %v1450
        %v1453 = vadd.f32 %v1446, %v1451
        %v1454 = vpack.c.bf16 %v1453, %v1453
        %v1455 = vld [vmem:[%s734] sm:$0xf]
        %v1456 = vld [vmem:[%s734 + $0x4] sm:$0xf]
        %v1457 = vld [vmem:[%s734 + $0x8] sm:$0xf]
        %v1458 = vld [vmem:[%s734 + $0xc] sm:$0xf]
        %v1459 = vld [vmem:[%s737] sm:$0x1]
        %v1461 = vlaneseq
        %v1462 = vshrl.u32 %v1461, 7
        %v1463 = vsub.s32 0, %v1462
        %v1464 = vrot.slane %v1459, %v1463
        %v1470 = vunpack.c.l.b16 %v1455
        %v1471 = vunpack.c.l.b16 %v1456
        %v1472 = vunpack.c.l.b16 %v1457
        %v1473 = vunpack.c.l.b16 %v1458
        %v1474 = vpack.c.b16 %v1471, %v1470
        %v1475 = vpack.c.b16 %v1473, %v1472
        %v1479 = vsel %vm776, %v1454, 0
        %1481 = vmatprep.subr.bf16.mxu0 0
        %1482 = vmatpush1.bf16.msra.mxu0 %v1474
        %1483 = vmatprep.subr.bf16.mxu0 0
        %1484 = vmatpush1.bf16.msra.mxu0 %v1475
        %1485 = vmatprep.subr.bf16.mxu0 0
        %1486 = vmatpush1.bf16.msra.mxu0 0
        %1487 = vmatprep.subr.bf16.mxu0 0
        %1488 = vmatpush1.bf16.msra.mxu0 0
        %1489 = vmatprep.subr.bf16.mxu0 0
        %1490 = vmatpush1.bf16.msra.mxu0 0
        %1491 = vmatprep.subr.bf16.mxu0 0
        %1492 = vmatpush1.bf16.msra.mxu0 0
        %1493 = vmatprep.subr.bf16.mxu0 0
        %1494 = vmatpush1.bf16.msra.mxu0 0
        %1495 = vmatprep.subr.bf16.mxu0 0
        %1496 = vmatpush1.bf16.msra.mxu0 0
        %1497 = vmatprep.subr.bf16.mxu0 0
        %1498 = vmatpush1.bf16.msra.mxu0 0
        %1499 = vmatprep.subr.bf16.mxu0 0
        %1500 = vmatpush1.bf16.msra.mxu0 0
        %1501 = vmatprep.subr.bf16.mxu0 0
        %1502 = vmatpush1.bf16.msra.mxu0 0
        %1503 = vmatprep.subr.bf16.mxu0 0
        %1504 = vmatpush1.bf16.msra.mxu0 0
        %1505 = vmatprep.subr.bf16.mxu0 0
        %1506 = vmatpush1.bf16.msra.mxu0 0
        %1507 = vmatprep.subr.bf16.mxu0 0
        %1508 = vmatpush1.bf16.msra.mxu0 0
        %1509 = vmatprep.subr.bf16.mxu0 0
        %1510 = vmatpush1.bf16.msra.mxu0 0
        %1511 = vmatprep.subr.bf16.mxu0 0
        %1512 = vmatpush1.bf16.msra.mxu0 0
        %1513 = vmatprep.mubr.bf16.mxu0 0
        %1514 = vmatmul.mubr.bf16.gmra.mrb[0].mxu0 %v1479
        %v1515 = vpop.f32.mrb[0].mxu0
        %v1516 = vadd.f32 %v1464, %v1515
        %v1517 = vpop.f32.mrb[0].mxu0
        %v1518 = vpop.f32.mrb[0].mxu0
        %v1519 = vpop.f32.mrb[0].mxu0
        %1520 = vdwg.mxu0
        %v1521 = vmul.f32 %v1516, 1.702
        %v1522 = vxor.u32 %v1521, 2147483648
        %v1523 = vmul.f32 %v1522, 1.442695
        %v1524 = vpow.pop %v1523
        %v1525 = vadd.f32 %v1524, 1.0
        %v1526 = vrcp.pop %v1525
        %v1527 = vmul.f32 1.0, %v1526
        %v1528 = vmul.f32 %v1516, %v1527
        %v1529 = vpack.c.bf16 %v1528, %v1528
        %v1530 = vld [vmem:[%s742] sm:$0xf]
        %v1531 = vld [vmem:[%s742 + $0x4] sm:$0xf]
        %v1532 = vld [vmem:[%s742 + $0x8] sm:$0xf]
        %v1533 = vld [vmem:[%s742 + $0xc] sm:$0xf]
        %v1534 = vld [vmem:[%s742 + $0x10] sm:$0xf]
        %v1535 = vld [vmem:[%s742 + $0x14] sm:$0xf]
        %v1536 = vld [vmem:[%s742 + $0x18] sm:$0xf]
        %v1537 = vld [vmem:[%s742 + $0x1c] sm:$0xf]
        %v1538 = vld [vmem:[%s742 + $0x20] sm:$0xf]
        %v1539 = vld [vmem:[%s742 + $0x24] sm:$0xf]
        %v1540 = vld [vmem:[%s742 + $0x28] sm:$0xf]
        %v1541 = vld [vmem:[%s742 + $0x2c] sm:$0xf]
        %v1542 = vld [vmem:[%s742 + $0x30] sm:$0xf]
        %v1543 = vld [vmem:[%s742 + $0x34] sm:$0xf]
        %v1544 = vld [vmem:[%s742 + $0x38] sm:$0xf]
        %v1545 = vld [vmem:[%s742 + $0x3c] sm:$0xf]
        %v1546 = vld [vmem:[%s745] sm:$0x1]
        %v1548 = vlaneseq
        %v1549 = vshrl.u32 %v1548, 7
        %v1550 = vsub.s32 0, %v1549
        %v1551 = vrot.slane %v1546, %v1550
        %v1569 = vunpack.c.l.b16 %v1530
        %v1570 = vunpack.c.l.b16 %v1531
        %v1571 = vunpack.c.l.b16 %v1532
        %v1572 = vunpack.c.l.b16 %v1533
        %v1573 = vunpack.c.l.b16 %v1534
        %v1574 = vunpack.c.l.b16 %v1535
        %v1575 = vunpack.c.l.b16 %v1536
        %v1576 = vunpack.c.l.b16 %v1537
        %v1577 = vunpack.c.l.b16 %v1538
        %v1578 = vunpack.c.l.b16 %v1539
        %v1579 = vunpack.c.l.b16 %v1540
        %v1580 = vunpack.c.l.b16 %v1541
        %v1581 = vunpack.c.l.b16 %v1542
        %v1582 = vunpack.c.l.b16 %v1543
        %v1583 = vunpack.c.l.b16 %v1544
        %v1584 = vunpack.c.l.b16 %v1545
        %v1585 = vpack.c.b16 %v1570, %v1569
        %v1586 = vpack.c.b16 %v1572, %v1571
        %v1587 = vpack.c.b16 %v1574, %v1573
        %v1588 = vpack.c.b16 %v1576, %v1575
        %v1589 = vpack.c.b16 %v1578, %v1577
        %v1590 = vpack.c.b16 %v1580, %v1579
        %v1591 = vpack.c.b16 %v1582, %v1581
        %v1592 = vpack.c.b16 %v1584, %v1583
        %1601 = vmatprep.subr.bf16.mxu0 0
        %1602 = vmatpush1.bf16.msra.mxu0 %v1585
        %1603 = vmatprep.subr.bf16.mxu0 0
        %1604 = vmatpush1.bf16.msra.mxu0 %v1586
        %1605 = vmatprep.subr.bf16.mxu0 0
        %1606 = vmatpush1.bf16.msra.mxu0 %v1587
        %1607 = vmatprep.subr.bf16.mxu0 0
        %1608 = vmatpush1.bf16.msra.mxu0 %v1588
        %1609 = vmatprep.subr.bf16.mxu0 0
        %1610 = vmatpush1.bf16.msra.mxu0 %v1589
        %1611 = vmatprep.subr.bf16.mxu0 0
        %1612 = vmatpush1.bf16.msra.mxu0 %v1590
        %1613 = vmatprep.subr.bf16.mxu0 0
        %1614 = vmatpush1.bf16.msra.mxu0 %v1591
        %1615 = vmatprep.subr.bf16.mxu0 0
        %1616 = vmatpush1.bf16.msra.mxu0 %v1592
        %1617 = vmatprep.subr.bf16.mxu0 0
        %1618 = vmatpush1.bf16.msra.mxu0 0
        %1619 = vmatprep.subr.bf16.mxu0 0
        %1620 = vmatpush1.bf16.msra.mxu0 0
        %1621 = vmatprep.subr.bf16.mxu0 0
        %1622 = vmatpush1.bf16.msra.mxu0 0
        %1623 = vmatprep.subr.bf16.mxu0 0
        %1624 = vmatpush1.bf16.msra.mxu0 0
        %1625 = vmatprep.subr.bf16.mxu0 0
        %1626 = vmatpush1.bf16.msra.mxu0 0
        %1627 = vmatprep.subr.bf16.mxu0 0
        %1628 = vmatpush1.bf16.msra.mxu0 0
        %1629 = vmatprep.subr.bf16.mxu0 0
        %1630 = vmatpush1.bf16.msra.mxu0 0
        %1631 = vmatprep.subr.bf16.mxu0 0
        %1632 = vmatpush1.bf16.msra.mxu0 0
        %1633 = vmatprep.mubr.bf16.mxu0 0
        %1634 = vmatmul.mubr.bf16.gmra.mrb[0].mxu0 %v1529
        %v1635 = vpop.f32.mrb[0].mxu0
        %v1636 = vadd.f32 %v1551, %v1635
        %v1637 = vpop.f32.mrb[0].mxu0
        %v1638 = vpop.f32.mrb[0].mxu0
        %v1639 = vpop.f32.mrb[0].mxu0
        %1640 = vdwg.mxu0
        %v1641 = vadd.f32 %v1424, %v1636
        %1642 = vst.msk [vmem:[%s683] sm:$0xff] %vm776, %v1641
        %s1643 = sand.u32 %s444, 1
        %s1644 = scalar_lea.sflag [#allocation4], %s1643
        %s1645 = sand.u32 %s444, 1
        %s1646 = smul.addr %s1645, 8
        %s1647 = scalar_lea.vmem [#allocation3], %s1646
        // Predicated region
        $region89: #{tpu_custom_call.1} parent=79 // pred_check
          %p1648 = pneg %p454
        $region90: #{tpu_custom_call.1} parent=79 // pred_check_branch
          %1650 = sbr.rel (%p1648) target = $region92
        $region91: #{tpu_custom_call.1} parent=79 // pred_region
          %s1652 = ssub.s32 128, 128
          %1653 = vsyncadd %s1644, %s1652
          %s1654 = smul.addr %s33, 128
          %s1655 = scalar_lea.hbm %s15, %s1654
          %s1657 = sshll.u32 %s1647, 4
          %s1658 = int_to_ptr.vmem [resolvable:$true] %s1657
          %1660 = dma.vmem_to_hbm [thread:$0]  %s1658, 128, %s1655, %s1644
        $region92: #{tpu_custom_call.1} parent=79 // pred_fallthru
          _
      $region80: #{tpu_custom_call.1} parent=5 // pred_fallthru
        _
      %p1661 = scmp.le.s32.totalorder 2, %s24
      // Predicated region
      $region93: #{tpu_custom_call.1} parent=5 // pred_check
        %p1662 = pneg %p1661
      $region94: #{tpu_custom_call.1} parent=5 // pred_check_branch
        %1664 = sbr.rel (%p1662) target = $region96
      $region95: #{tpu_custom_call.1} parent=5 // pred_region
        %s1665 = ssub.s32 %s24, 2
        // Predicated region
        $region97: #{tpu_custom_call.1} parent=95 // pred_check
          %p1666 = pneg %p460
        $region98: #{tpu_custom_call.1} parent=95 // pred_check_branch
          %1668 = sbr.rel (%p1666) target = $region100
        $region99: #{tpu_custom_call.1} parent=95 // pred_region
          %s1669 = sand.u32 %s445, 1
          %s1670 = scalar_lea.sflag [#allocation4], %s1669
          %s1671 = sand.u32 %s445, 1
          %s1672 = smul.addr %s1671, 8
          %s1673 = scalar_lea.vmem [#allocation3], %s1672
          %1674 = dma.done %s1670, 128
        $region100: #{tpu_custom_call.1} parent=95 // pred_fallthru
          _
      $region96: #{tpu_custom_call.1} parent=5 // pred_fallthru
        _
    $region6: #{tpu_custom_call.1} parent=1 // loop_footer
      %s28 = sadd.s32 1, %s24
    $region7: #{tpu_custom_call.1} parent=1 // loop_footer_branch
      %23 = sbr.rel target = $region3
    $region8: #{tpu_custom_call.1} parent=1 // loop_exit
      _
    %1675 = vsyncpa [#allocation4], 1
    %s1676 = scalar_lea.sflag [#allocation4], 1
    %1677 = vsyncpa %s1676, 1

</llo_original>
